<compile_context>
chip_gen: v7x
topology: tpu7x:2x2x1
jax: 0.10.0
libtpu: 0.0.40
codegen_flags: <defaults>
</compile_context>

<pallas_src>
import functools
import math

import jax
import jax.numpy as jnp
from jax.experimental import pallas as pl
from jax.experimental.pallas import tpu as pltpu  # noqa: F401

# ----------------------------- config (small synthetic BERT) ------------------
VOCAB = 100
HIDDEN = 32
NUM_HEADS = 2
HEAD_DIM = HIDDEN // NUM_HEADS
INTERMEDIATE = 64
NUM_LAYERS = 2
MAX_POS = 16
NUM_LABELS = 2
LN_EPS = 1e-12  # BERT default

QKV_OUT = 3 * NUM_HEADS * HEAD_DIM        # 96 fused q|k|v output lanes
VEC_ROWS = 8                              # packed per-layer vector rows
VEC_W = 128                               # packed lane width (one vreg row)
# packed per-layer vector row indices
_BQKV, _BO, _LN1G, _LN1B, _B1, _B2, _LN2G, _LN2B = range(VEC_ROWS)
# packed misc vector row indices
_EMB_LN_G, _EMB_LN_B, _POOL_B, _CLS_B = range(4)


# ----------------------------- in-kernel helpers (pure value ops) -------------
def _layer_norm(x, g, b):
    mu = jnp.mean(x, axis=-1, keepdims=True)
    var = jnp.mean((x - mu) * (x - mu), axis=-1, keepdims=True)
    return (x - mu) * jax.lax.rsqrt(var + LN_EPS) * g + b


def _gelu(x):
    # tanh-approximation of GELU (HF "gelu_new"); exact erf-GELU differs <1e-3.
    c = math.sqrt(2.0 / math.pi)
    return 0.5 * x * (1.0 + jnp.tanh(c * (x + 0.044715 * x * x * x)))


def _mm(a, b):
    """bf16 MXU matmul with f32 accumulation (weights already bf16)."""
    return jnp.dot(a.astype(jnp.bfloat16), b.astype(jnp.bfloat16),
                   preferred_element_type=jnp.float32)


# ----------------------------- fused forward kernel ---------------------------
def _fused_kernel(emb_ref, bias_ref, vec_ref, misc_ref,
                  wqkv_ref, wo_ref, w1_ref, w2_ref,
                  pool_w_ref, cls_w_ref,
                  logits_ref, *, B, S):
    """Whole BERT forward for a [B*S, HIDDEN] embedding slab, fully in VMEM."""
    H, NH, HD, I = HIDDEN, NUM_HEADS, HEAD_DIM, INTERMEDIATE
    scale = 1.0 / math.sqrt(HD)

    # additive attention bias (key-padding + cross-batch block-diagonal mask)
    bias = bias_ref[...]                                          # [B*S, B*S]

    # --- embedding LayerNorm
    h = _layer_norm(emb_ref[...],
                    misc_ref[_EMB_LN_G:_EMB_LN_G + 1, :],
                    misc_ref[_EMB_LN_B:_EMB_LN_B + 1, :])         # [B*S, H]

    # --- encoder layers (static Python loop -> fully unrolled)
    for l in range(NUM_LAYERS):
        vecs = vec_ref[l]                                         # [8, VEC_W]
        x = h

        # fused QKV projection: one [B*S,H] @ [H,3*NH*HD] matmul per layer.
        qkv = _mm(x, wqkv_ref[l]) + vecs[_BQKV:_BQKV + 1, :QKV_OUT]  # [B*S,96]

        # per-head block-diagonal attention over all B*S rows at once
        ctx_heads = []
        for hh in range(NH):
            q_h = qkv[:, hh * HD:(hh + 1) * HD]                   # [B*S, HD]
            k_h = qkv[:, NH * HD + hh * HD:NH * HD + (hh + 1) * HD]
            v_h = qkv[:, 2 * NH * HD + hh * HD:2 * NH * HD + (hh + 1) * HD]
            # scores = q_h @ k_h^T (contract head_dim of both, no transpose op)
            s = jax.lax.dot_general(
                q_h.astype(jnp.bfloat16), k_h.astype(jnp.bfloat16),
                (((1,), (1,)), ((), ())),
                preferred_element_type=jnp.float32) * scale       # [B*S, B*S]
            s = s + bias
            s = s - jnp.max(s, axis=-1, keepdims=True)
            p = jnp.exp(s)
            p = p * pl.reciprocal(jnp.sum(p, axis=-1, keepdims=True),
                                  approx=True)
            ctx_heads.append(_mm(p, v_h))                         # [B*S, HD]
        ctx = jnp.concatenate(ctx_heads, axis=-1)                 # [B*S, NH*HD]

        # fused output projection over all heads, then residual + LN
        attn = _mm(ctx, wo_ref[l]) + vecs[_BO:_BO + 1, :H]
        h1 = _layer_norm(attn + x, vecs[_LN1G:_LN1G + 1, :H],
                         vecs[_LN1B:_LN1B + 1, :H])

        # feed-forward, residual + LN
        ffn = _gelu(_mm(h1, w1_ref[l]) + vecs[_B1:_B1 + 1, :I])
        ffn = _mm(ffn, w2_ref[l]) + vecs[_B2:_B2 + 1, :H]
        h = _layer_norm(ffn + h1, vecs[_LN2G:_LN2G + 1, :H],
                        vecs[_LN2B:_LN2B + 1, :H])

    # --- batched pooler + classifier head on the [CLS] token of each sequence.
    # CLS rows gathered with a tiny one-hot selection matmul (no per-row
    # slicing / masked stores); single store of the [B, NUM_LABELS] logits.
    col = jax.lax.broadcasted_iota(jnp.int32, (B, B * S), 1)
    row = jax.lax.broadcasted_iota(jnp.int32, (B, B * S), 0)
    sel = (col == row * S).astype(jnp.float32)                    # [B, B*S]
    cls_rows = jnp.dot(sel, h, preferred_element_type=jnp.float32)  # [B, H]

    pooled = jnp.tanh(_mm(cls_rows, pool_w_ref[...])
                      + misc_ref[_POOL_B:_POOL_B + 1, :])
    logits = _mm(pooled, cls_w_ref[...]) + misc_ref[_CLS_B:_CLS_B + 1,
                                                    :NUM_LABELS]
    logits_ref[...] = logits.astype(logits_ref.dtype)


# ----------------------------- parameter init ---------------------------------
def init_params(key):
    """Deterministic synthetic BERT weights, packed for one fused pallas_call."""
    std = 0.02
    L, H, I, NH, HD = NUM_LAYERS, HIDDEN, INTERMEDIATE, NUM_HEADS, HEAD_DIM

    def nrm(k, shape):
        return (std * jax.random.normal(k, shape)).astype(jnp.float32)

    keys = iter(jax.random.split(key, 16))

    # fused weight slabs (bf16: MXU-native on v5e/v6e/v7x)
    wqkv = nrm(next(keys), (L, H, QKV_OUT)).astype(jnp.bfloat16)   # q|k|v, heads
    wo = nrm(next(keys), (L, NH * HD, H)).astype(jnp.bfloat16)
    w1 = nrm(next(keys), (L, H, I)).astype(jnp.bfloat16)
    w2 = nrm(next(keys), (L, I, H)).astype(jnp.bfloat16)
    pool_w = nrm(next(keys), (H, H)).astype(jnp.bfloat16)
    cls_w = nrm(next(keys), (H, NUM_LABELS)).astype(jnp.bfloat16)

    # packed per-layer vectors [L, 8, 128]:
    # rows: bqkv | bo | ln1_g | ln1_b | b1 | b2 | ln2_g | ln2_b  (zero-padded)
    vecs = jnp.zeros((L, VEC_ROWS, VEC_W), jnp.float32)
    vecs = vecs.at[:, _LN1G, :H].set(1.0)      # LayerNorm gammas init to 1
    vecs = vecs.at[:, _LN2G, :H].set(1.0)
    # (all biases and LayerNorm betas init to 0 — already zero)

    # packed misc vectors [4, H]: emb_ln_g | emb_ln_b | pool_b | cls_b (padded)
    misc = jnp.zeros((4, H), jnp.float32)
    misc = misc.at[_EMB_LN_G, :].set(1.0)

    return {
        "word_emb": nrm(next(keys), (VOCAB, H)),
        "pos_emb": nrm(next(keys), (MAX_POS, H)),
        "type_emb": nrm(next(keys), (2, H)),
        "vecs": vecs,
        "misc": misc,
        "wqkv": wqkv, "wo": wo, "w1": w1, "w2": w2,
        "pool_w": pool_w, "cls_w": cls_w,
    }


# ----------------------------- forward pass ------------------------------------
@jax.jit
def text_classifier_forward(params, input_ids, attention_mask):
    """Returns logits [B, NUM_LABELS], mirroring TextClassifier.forward."""
    B, S = input_ids.shape
    H = HIDDEN

    # embeddings: data-dependent gather stays in XLA (glue); token_type_id 0 only.
    # TODO(synk): real HF model loads pretrained weights from disk; synthetic here.
    emb = (params["word_emb"][input_ids]
           + params["pos_emb"][:S][None, :, :]
           + params["type_emb"][0][None, None, :]).reshape(B * S, H)

    # additive attention bias [B*S, B*S]: key-padding mask + block-diagonal
    # cross-batch mask, so the kernel runs attention over all B*S rows at once.
    batch_of = jnp.arange(B * S, dtype=jnp.int32) // S
    same_batch = batch_of[:, None] == batch_of[None, :]
    key_valid = attention_mask.reshape(B * S).astype(bool)
    bias = jnp.where(same_batch & key_valid[None, :], 0.0, -1e9)
    bias = bias.astype(jnp.float32)

    kernel = functools.partial(_fused_kernel, B=B, S=S)
    # Single fused grid-less pallas_call: every operand resident in VMEM.
    logits = pl.pallas_call(
        kernel,
        out_shape=jax.ShapeDtypeStruct((B, NUM_LABELS), jnp.float32),
    )(emb, bias, params["vecs"], params["misc"],
      params["wqkv"], params["wo"], params["w1"], params["w2"],
      params["pool_w"], params["cls_w"])
    return logits                                          # [B, NUM_LABELS]


# ----------------------------- main ---------------------------------------------
if __name__ == "__main__":
    key = jax.random.PRNGKey(0)
    k_par, k_ids = jax.random.split(key)

    B, S = 2, 8
    params = init_params(k_par)
    input_ids = jax.random.randint(k_ids, (B, S), 0, VOCAB, dtype=jnp.int32)
    attention_mask = jnp.array([[1, 1, 1, 1, 1, 1, 0, 0],
                                [1, 1, 1, 1, 1, 1, 1, 1]], dtype=jnp.int32)

    logits = text_classifier_forward(params, input_ids, attention_mask)
    logits = jax.block_until_ready(logits)
    assert logits.shape == (B, NUM_LABELS) and logits.dtype == jnp.float32
    assert bool(jnp.all(jnp.isfinite(logits)))
    print("KERNEL_OK")
</pallas_src>

<mosaic_0001>
module attributes {stable_mosaic.version = 11 : i64} {
  func.func @_fused_kernel(%arg0: memref<16x32xf32, #tpu.memory_space<vmem>>, %arg1: memref<16x16xf32, #tpu.memory_space<vmem>>, %arg2: memref<2x8x128xf32, #tpu.memory_space<vmem>>, %arg3: memref<4x32xf32, #tpu.memory_space<vmem>>, %arg4: memref<2x32x96xbf16, #tpu.memory_space<vmem>>, %arg5: memref<2x32x32xbf16, #tpu.memory_space<vmem>>, %arg6: memref<2x32x64xbf16, #tpu.memory_space<vmem>>, %arg7: memref<2x64x32xbf16, #tpu.memory_space<vmem>>, %arg8: memref<32x32xbf16, #tpu.memory_space<vmem>>, %arg9: memref<32x2xbf16, #tpu.memory_space<vmem>>, %arg10: memref<2x2xf32, #tpu.memory_space<vmem>>) attributes {dimension_semantics = [], scalar_prefetch = 0 : i64, scratch_operands = 0 : i64, tpu.core_type = #tpu.core_type<tc>} {
    %c0 = arith.constant 0 : index
    %c0_0 = arith.constant 0 : index
    %0 = vector.load %arg1[%c0, %c0_0] : memref<16x16xf32, #tpu.memory_space<vmem>>, vector<16x16xf32>
    %c0_1 = arith.constant 0 : index
    %c0_2 = arith.constant 0 : index
    %1 = vector.load %arg0[%c0_1, %c0_2] : memref<16x32xf32, #tpu.memory_space<vmem>>, vector<16x32xf32>
    %c0_3 = arith.constant 0 : index
    %c0_4 = arith.constant 0 : index
    %2 = vector.load %arg3[%c0_3, %c0_4] : memref<4x32xf32, #tpu.memory_space<vmem>>, vector<1x32xf32>
    %c1 = arith.constant 1 : index
    %c0_5 = arith.constant 0 : index
    %3 = vector.load %arg3[%c1, %c0_5] : memref<4x32xf32, #tpu.memory_space<vmem>>, vector<1x32xf32>
    %cst = arith.constant dense<0.000000e+00> : vector<16xf32>
    %4 = vector.multi_reduction <add>, %1, %cst [1] : vector<16x32xf32> to vector<16xf32>
    %5 = vector.shape_cast %4 : vector<16xf32> to vector<16x1xf32>
    %cst_6 = arith.constant 3.200000e+01 : f32
    %6 = vector.broadcast %cst_6 : f32 to vector<16x1xf32>
    %7 = arith.divf %5, %6 : vector<16x1xf32>
    %8 = vector.broadcast %7 : vector<16x1xf32> to vector<16x32xf32>
    %9 = arith.subf %1, %8 : vector<16x32xf32>
    %10 = vector.broadcast %7 : vector<16x1xf32> to vector<16x32xf32>
    %11 = arith.subf %1, %10 : vector<16x32xf32>
    %12 = arith.mulf %9, %11 : vector<16x32xf32>
    %cst_7 = arith.constant dense<0.000000e+00> : vector<16xf32>
    %13 = vector.multi_reduction <add>, %12, %cst_7 [1] : vector<16x32xf32> to vector<16xf32>
    %14 = vector.shape_cast %13 : vector<16xf32> to vector<16x1xf32>
    %cst_8 = arith.constant 3.200000e+01 : f32
    %15 = vector.broadcast %cst_8 : f32 to vector<16x1xf32>
    %16 = arith.divf %14, %15 : vector<16x1xf32>
    %17 = vector.broadcast %7 : vector<16x1xf32> to vector<16x32xf32>
    %18 = arith.subf %1, %17 : vector<16x32xf32>
    %cst_9 = arith.constant 9.99999996E-13 : f32
    %19 = vector.broadcast %cst_9 : f32 to vector<16x1xf32>
    %20 = arith.addf %16, %19 : vector<16x1xf32>
    %21 = math.rsqrt %20 : vector<16x1xf32>
    %22 = vector.broadcast %21 : vector<16x1xf32> to vector<16x32xf32>
    %23 = arith.mulf %18, %22 : vector<16x32xf32>
    %24 = vector.broadcast %2 : vector<1x32xf32> to vector<16x32xf32>
    %25 = arith.mulf %23, %24 : vector<16x32xf32>
    %26 = vector.broadcast %3 : vector<1x32xf32> to vector<16x32xf32>
    %27 = arith.addf %25, %26 : vector<16x32xf32>
    %c0_10 = arith.constant 0 : index
    %c0_11 = arith.constant 0 : index
    %c0_12 = arith.constant 0 : index
    %28 = vector.load %arg2[%c0_10, %c0_11, %c0_12] : memref<2x8x128xf32, #tpu.memory_space<vmem>>, vector<1x8x128xf32>
    %29 = vector.shape_cast %28 : vector<1x8x128xf32> to vector<8x128xf32>
    %c0_13 = arith.constant 0 : index
    %c0_14 = arith.constant 0 : index
    %c0_15 = arith.constant 0 : index
    %30 = vector.load %arg4[%c0_13, %c0_14, %c0_15] : memref<2x32x96xbf16, #tpu.memory_space<vmem>>, vector<1x32x96xbf16>
    %31 = vector.shape_cast %30 : vector<1x32x96xbf16> to vector<32x96xbf16>
    %32 = arith.truncf %27 : vector<16x32xf32> to vector<16x32xbf16>
    %cst_16 = arith.constant dense<0.000000e+00> : vector<16x96xf32>
    %33 = tpu.matmul %32, %31, %cst_16 {dimension_numbers = #tpu.dot_dimension_numbers<[1], [0], [0], [1], [0, 0, 1, 1], [], []>} : vector<16x32xbf16>, vector<32x96xbf16>, vector<16x96xf32> -> vector<16x96xf32>
    %34 = vector.extract_strided_slice %29 {offsets = [0, 0], sizes = [1, 96], strides = [1, 1]} : vector<8x128xf32> to vector<1x96xf32>
    %35 = vector.broadcast %34 : vector<1x96xf32> to vector<16x96xf32>
    %36 = arith.addf %33, %35 : vector<16x96xf32>
    %37 = vector.extract_strided_slice %36 {offsets = [0, 0], sizes = [16, 16], strides = [1, 1]} : vector<16x96xf32> to vector<16x16xf32>
    %38 = vector.extract_strided_slice %36 {offsets = [0, 32], sizes = [16, 16], strides = [1, 1]} : vector<16x96xf32> to vector<16x16xf32>
    %39 = vector.extract_strided_slice %36 {offsets = [0, 64], sizes = [16, 16], strides = [1, 1]} : vector<16x96xf32> to vector<16x16xf32>
    %40 = arith.truncf %37 : vector<16x16xf32> to vector<16x16xbf16>
    %41 = arith.truncf %38 : vector<16x16xf32> to vector<16x16xbf16>
    %cst_17 = arith.constant dense<0.000000e+00> : vector<16x16xf32>
    %42 = tpu.matmul %40, %41, %cst_17 {dimension_numbers = #tpu.dot_dimension_numbers<[1], [1], [0], [0], [0, 0, 1, 0], [], []>} : vector<16x16xbf16>, vector<16x16xbf16>, vector<16x16xf32> -> vector<16x16xf32>
    %cst_18 = arith.constant 2.500000e-01 : f32
    %43 = vector.broadcast %cst_18 : f32 to vector<16x16xf32>
    %44 = arith.mulf %42, %43 : vector<16x16xf32>
    %45 = arith.addf %44, %0 : vector<16x16xf32>
    %cst_19 = arith.constant dense<0xFF800000> : vector<16xf32>
    %46 = vector.multi_reduction <maximumf>, %45, %cst_19 [1] : vector<16x16xf32> to vector<16xf32>
    %47 = vector.shape_cast %46 : vector<16xf32> to vector<16x1xf32>
    %48 = vector.broadcast %47 : vector<16x1xf32> to vector<16x16xf32>
    %49 = arith.subf %45, %48 : vector<16x16xf32>
    %50 = math.exp %49 : vector<16x16xf32>
    %cst_20 = arith.constant dense<0.000000e+00> : vector<16xf32>
    %51 = vector.multi_reduction <add>, %50, %cst_20 [1] : vector<16x16xf32> to vector<16xf32>
    %52 = vector.shape_cast %51 : vector<16xf32> to vector<16x1xf32>
    %53 = tpu.reciprocal %52 {approx = true} : vector<16x1xf32> -> vector<16x1xf32>
    %54 = vector.broadcast %53 : vector<16x1xf32> to vector<16x16xf32>
    %55 = arith.mulf %50, %54 : vector<16x16xf32>
    %56 = arith.truncf %55 : vector<16x16xf32> to vector<16x16xbf16>
    %57 = arith.truncf %39 : vector<16x16xf32> to vector<16x16xbf16>
    %cst_21 = arith.constant dense<0.000000e+00> : vector<16x16xf32>
    %58 = tpu.matmul %56, %57, %cst_21 {dimension_numbers = #tpu.dot_dimension_numbers<[1], [0], [0], [1], [0, 0, 1, 1], [], []>} : vector<16x16xbf16>, vector<16x16xbf16>, vector<16x16xf32> -> vector<16x16xf32>
    %59 = vector.extract_strided_slice %36 {offsets = [0, 16], sizes = [16, 16], strides = [1, 1]} : vector<16x96xf32> to vector<16x16xf32>
    %60 = vector.extract_strided_slice %36 {offsets = [0, 48], sizes = [16, 16], strides = [1, 1]} : vector<16x96xf32> to vector<16x16xf32>
    %61 = vector.extract_strided_slice %36 {offsets = [0, 80], sizes = [16, 16], strides = [1, 1]} : vector<16x96xf32> to vector<16x16xf32>
    %62 = arith.truncf %59 : vector<16x16xf32> to vector<16x16xbf16>
    %63 = arith.truncf %60 : vector<16x16xf32> to vector<16x16xbf16>
    %cst_22 = arith.constant dense<0.000000e+00> : vector<16x16xf32>
    %64 = tpu.matmul %62, %63, %cst_22 {dimension_numbers = #tpu.dot_dimension_numbers<[1], [1], [0], [0], [0, 0, 1, 0], [], []>} : vector<16x16xbf16>, vector<16x16xbf16>, vector<16x16xf32> -> vector<16x16xf32>
    %cst_23 = arith.constant 2.500000e-01 : f32
    %65 = vector.broadcast %cst_23 : f32 to vector<16x16xf32>
    %66 = arith.mulf %64, %65 : vector<16x16xf32>
    %67 = arith.addf %66, %0 : vector<16x16xf32>
    %cst_24 = arith.constant dense<0xFF800000> : vector<16xf32>
    %68 = vector.multi_reduction <maximumf>, %67, %cst_24 [1] : vector<16x16xf32> to vector<16xf32>
    %69 = vector.shape_cast %68 : vector<16xf32> to vector<16x1xf32>
    %70 = vector.broadcast %69 : vector<16x1xf32> to vector<16x16xf32>
    %71 = arith.subf %67, %70 : vector<16x16xf32>
    %72 = math.exp %71 : vector<16x16xf32>
    %cst_25 = arith.constant dense<0.000000e+00> : vector<16xf32>
    %73 = vector.multi_reduction <add>, %72, %cst_25 [1] : vector<16x16xf32> to vector<16xf32>
    %74 = vector.shape_cast %73 : vector<16xf32> to vector<16x1xf32>
    %75 = tpu.reciprocal %74 {approx = true} : vector<16x1xf32> -> vector<16x1xf32>
    %76 = vector.broadcast %75 : vector<16x1xf32> to vector<16x16xf32>
    %77 = arith.mulf %72, %76 : vector<16x16xf32>
    %78 = arith.truncf %77 : vector<16x16xf32> to vector<16x16xbf16>
    %79 = arith.truncf %61 : vector<16x16xf32> to vector<16x16xbf16>
    %cst_26 = arith.constant dense<0.000000e+00> : vector<16x16xf32>
    %80 = tpu.matmul %78, %79, %cst_26 {dimension_numbers = #tpu.dot_dimension_numbers<[1], [0], [0], [1], [0, 0, 1, 1], [], []>} : vector<16x16xbf16>, vector<16x16xbf16>, vector<16x16xf32> -> vector<16x16xf32>
    %81 = tpu.concatenate %58, %80 in 1 : vector<16x16xf32>, vector<16x16xf32> -> vector<16x32xf32>
    %c0_27 = arith.constant 0 : index
    %c0_28 = arith.constant 0 : index
    %c0_29 = arith.constant 0 : index
    %82 = vector.load %arg5[%c0_27, %c0_28, %c0_29] : memref<2x32x32xbf16, #tpu.memory_space<vmem>>, vector<1x32x32xbf16>
    %83 = vector.shape_cast %82 : vector<1x32x32xbf16> to vector<32x32xbf16>
    %84 = arith.truncf %81 : vector<16x32xf32> to vector<16x32xbf16>
    %cst_30 = arith.constant dense<0.000000e+00> : vector<16x32xf32>
    %85 = tpu.matmul %84, %83, %cst_30 {dimension_numbers = #tpu.dot_dimension_numbers<[1], [0], [0], [1], [0, 0, 1, 1], [], []>} : vector<16x32xbf16>, vector<32x32xbf16>, vector<16x32xf32> -> vector<16x32xf32>
    %86 = vector.extract_strided_slice %29 {offsets = [1, 0], sizes = [1, 32], strides = [1, 1]} : vector<8x128xf32> to vector<1x32xf32>
    %87 = vector.broadcast %86 : vector<1x32xf32> to vector<16x32xf32>
    %88 = arith.addf %85, %87 : vector<16x32xf32>
    %89 = arith.addf %88, %27 : vector<16x32xf32>
    %90 = vector.extract_strided_slice %29 {offsets = [2, 0], sizes = [1, 32], strides = [1, 1]} : vector<8x128xf32> to vector<1x32xf32>
    %91 = vector.extract_strided_slice %29 {offsets = [3, 0], sizes = [1, 32], strides = [1, 1]} : vector<8x128xf32> to vector<1x32xf32>
    %cst_31 = arith.constant dense<0.000000e+00> : vector<16xf32>
    %92 = vector.multi_reduction <add>, %89, %cst_31 [1] : vector<16x32xf32> to vector<16xf32>
    %93 = vector.shape_cast %92 : vector<16xf32> to vector<16x1xf32>
    %cst_32 = arith.constant 3.200000e+01 : f32
    %94 = vector.broadcast %cst_32 : f32 to vector<16x1xf32>
    %95 = arith.divf %93, %94 : vector<16x1xf32>
    %96 = vector.broadcast %95 : vector<16x1xf32> to vector<16x32xf32>
    %97 = arith.subf %89, %96 : vector<16x32xf32>
    %98 = vector.broadcast %95 : vector<16x1xf32> to vector<16x32xf32>
    %99 = arith.subf %89, %98 : vector<16x32xf32>
    %100 = arith.mulf %97, %99 : vector<16x32xf32>
    %cst_33 = arith.constant dense<0.000000e+00> : vector<16xf32>
    %101 = vector.multi_reduction <add>, %100, %cst_33 [1] : vector<16x32xf32> to vector<16xf32>
    %102 = vector.shape_cast %101 : vector<16xf32> to vector<16x1xf32>
    %cst_34 = arith.constant 3.200000e+01 : f32
    %103 = vector.broadcast %cst_34 : f32 to vector<16x1xf32>
    %104 = arith.divf %102, %103 : vector<16x1xf32>
    %105 = vector.broadcast %95 : vector<16x1xf32> to vector<16x32xf32>
    %106 = arith.subf %89, %105 : vector<16x32xf32>
    %cst_35 = arith.constant 9.99999996E-13 : f32
    %107 = vector.broadcast %cst_35 : f32 to vector<16x1xf32>
    %108 = arith.addf %104, %107 : vector<16x1xf32>
    %109 = math.rsqrt %108 : vector<16x1xf32>
    %110 = vector.broadcast %109 : vector<16x1xf32> to vector<16x32xf32>
    %111 = arith.mulf %106, %110 : vector<16x32xf32>
    %112 = vector.broadcast %90 : vector<1x32xf32> to vector<16x32xf32>
    %113 = arith.mulf %111, %112 : vector<16x32xf32>
    %114 = vector.broadcast %91 : vector<1x32xf32> to vector<16x32xf32>
    %115 = arith.addf %113, %114 : vector<16x32xf32>
    %c0_36 = arith.constant 0 : index
    %c0_37 = arith.constant 0 : index
    %c0_38 = arith.constant 0 : index
    %116 = vector.load %arg6[%c0_36, %c0_37, %c0_38] : memref<2x32x64xbf16, #tpu.memory_space<vmem>>, vector<1x32x64xbf16>
    %117 = vector.shape_cast %116 : vector<1x32x64xbf16> to vector<32x64xbf16>
    %118 = arith.truncf %115 : vector<16x32xf32> to vector<16x32xbf16>
    %cst_39 = arith.constant dense<0.000000e+00> : vector<16x64xf32>
    %119 = tpu.matmul %118, %117, %cst_39 {dimension_numbers = #tpu.dot_dimension_numbers<[1], [0], [0], [1], [0, 0, 1, 1], [], []>} : vector<16x32xbf16>, vector<32x64xbf16>, vector<16x64xf32> -> vector<16x64xf32>
    %120 = vector.extract_strided_slice %29 {offsets = [4, 0], sizes = [1, 64], strides = [1, 1]} : vector<8x128xf32> to vector<1x64xf32>
    %121 = vector.broadcast %120 : vector<1x64xf32> to vector<16x64xf32>
    %122 = arith.addf %119, %121 : vector<16x64xf32>
    %cst_40 = arith.constant 5.000000e-01 : f32
    %123 = vector.broadcast %cst_40 : f32 to vector<16x64xf32>
    %124 = arith.mulf %123, %122 : vector<16x64xf32>
    %cst_41 = arith.constant 4.471500e-02 : f32
    %125 = vector.broadcast %cst_41 : f32 to vector<16x64xf32>
    %126 = arith.mulf %125, %122 : vector<16x64xf32>
    %127 = arith.mulf %126, %122 : vector<16x64xf32>
    %128 = arith.mulf %127, %122 : vector<16x64xf32>
    %129 = arith.addf %122, %128 : vector<16x64xf32>
    %cst_42 = arith.constant 0.797884583 : f32
    %130 = vector.broadcast %cst_42 : f32 to vector<16x64xf32>
    %131 = arith.mulf %130, %129 : vector<16x64xf32>
    %132 = math.tanh %131 : vector<16x64xf32>
    %cst_43 = arith.constant 1.000000e+00 : f32
    %133 = vector.broadcast %cst_43 : f32 to vector<16x64xf32>
    %134 = arith.addf %133, %132 : vector<16x64xf32>
    %135 = arith.mulf %124, %134 : vector<16x64xf32>
    %c0_44 = arith.constant 0 : index
    %c0_45 = arith.constant 0 : index
    %c0_46 = arith.constant 0 : index
    %136 = vector.load %arg7[%c0_44, %c0_45, %c0_46] : memref<2x64x32xbf16, #tpu.memory_space<vmem>>, vector<1x64x32xbf16>
    %137 = vector.shape_cast %136 : vector<1x64x32xbf16> to vector<64x32xbf16>
    %138 = arith.truncf %135 : vector<16x64xf32> to vector<16x64xbf16>
    %cst_47 = arith.constant dense<0.000000e+00> : vector<16x32xf32>
    %139 = tpu.matmul %138, %137, %cst_47 {dimension_numbers = #tpu.dot_dimension_numbers<[1], [0], [0], [1], [0, 0, 1, 1], [], []>} : vector<16x64xbf16>, vector<64x32xbf16>, vector<16x32xf32> -> vector<16x32xf32>
    %140 = vector.extract_strided_slice %29 {offsets = [5, 0], sizes = [1, 32], strides = [1, 1]} : vector<8x128xf32> to vector<1x32xf32>
    %141 = vector.broadcast %140 : vector<1x32xf32> to vector<16x32xf32>
    %142 = arith.addf %139, %141 : vector<16x32xf32>
    %143 = arith.addf %142, %115 : vector<16x32xf32>
    %144 = vector.extract_strided_slice %29 {offsets = [6, 0], sizes = [1, 32], strides = [1, 1]} : vector<8x128xf32> to vector<1x32xf32>
    %145 = vector.extract_strided_slice %29 {offsets = [7, 0], sizes = [1, 32], strides = [1, 1]} : vector<8x128xf32> to vector<1x32xf32>
    %cst_48 = arith.constant dense<0.000000e+00> : vector<16xf32>
    %146 = vector.multi_reduction <add>, %143, %cst_48 [1] : vector<16x32xf32> to vector<16xf32>
    %147 = vector.shape_cast %146 : vector<16xf32> to vector<16x1xf32>
    %cst_49 = arith.constant 3.200000e+01 : f32
    %148 = vector.broadcast %cst_49 : f32 to vector<16x1xf32>
    %149 = arith.divf %147, %148 : vector<16x1xf32>
    %150 = vector.broadcast %149 : vector<16x1xf32> to vector<16x32xf32>
    %151 = arith.subf %143, %150 : vector<16x32xf32>
    %152 = vector.broadcast %149 : vector<16x1xf32> to vector<16x32xf32>
    %153 = arith.subf %143, %152 : vector<16x32xf32>
    %154 = arith.mulf %151, %153 : vector<16x32xf32>
    %cst_50 = arith.constant dense<0.000000e+00> : vector<16xf32>
    %155 = vector.multi_reduction <add>, %154, %cst_50 [1] : vector<16x32xf32> to vector<16xf32>
    %156 = vector.shape_cast %155 : vector<16xf32> to vector<16x1xf32>
    %cst_51 = arith.constant 3.200000e+01 : f32
    %157 = vector.broadcast %cst_51 : f32 to vector<16x1xf32>
    %158 = arith.divf %156, %157 : vector<16x1xf32>
    %159 = vector.broadcast %149 : vector<16x1xf32> to vector<16x32xf32>
    %160 = arith.subf %143, %159 : vector<16x32xf32>
    %cst_52 = arith.constant 9.99999996E-13 : f32
    %161 = vector.broadcast %cst_52 : f32 to vector<16x1xf32>
    %162 = arith.addf %158, %161 : vector<16x1xf32>
    %163 = math.rsqrt %162 : vector<16x1xf32>
    %164 = vector.broadcast %163 : vector<16x1xf32> to vector<16x32xf32>
    %165 = arith.mulf %160, %164 : vector<16x32xf32>
    %166 = vector.broadcast %144 : vector<1x32xf32> to vector<16x32xf32>
    %167 = arith.mulf %165, %166 : vector<16x32xf32>
    %168 = vector.broadcast %145 : vector<1x32xf32> to vector<16x32xf32>
    %169 = arith.addf %167, %168 : vector<16x32xf32>
    %c1_53 = arith.constant 1 : index
    %c0_54 = arith.constant 0 : index
    %c0_55 = arith.constant 0 : index
    %170 = vector.load %arg2[%c1_53, %c0_54, %c0_55] : memref<2x8x128xf32, #tpu.memory_space<vmem>>, vector<1x8x128xf32>
    %171 = vector.shape_cast %170 : vector<1x8x128xf32> to vector<8x128xf32>
    %c1_56 = arith.constant 1 : index
    %c0_57 = arith.constant 0 : index
    %c0_58 = arith.constant 0 : index
    %172 = vector.load %arg4[%c1_56, %c0_57, %c0_58] : memref<2x32x96xbf16, #tpu.memory_space<vmem>>, vector<1x32x96xbf16>
    %173 = vector.shape_cast %172 : vector<1x32x96xbf16> to vector<32x96xbf16>
    %174 = arith.truncf %169 : vector<16x32xf32> to vector<16x32xbf16>
    %cst_59 = arith.constant dense<0.000000e+00> : vector<16x96xf32>
    %175 = tpu.matmul %174, %173, %cst_59 {dimension_numbers = #tpu.dot_dimension_numbers<[1], [0], [0], [1], [0, 0, 1, 1], [], []>} : vector<16x32xbf16>, vector<32x96xbf16>, vector<16x96xf32> -> vector<16x96xf32>
    %176 = vector.extract_strided_slice %171 {offsets = [0, 0], sizes = [1, 96], strides = [1, 1]} : vector<8x128xf32> to vector<1x96xf32>
    %177 = vector.broadcast %176 : vector<1x96xf32> to vector<16x96xf32>
    %178 = arith.addf %175, %177 : vector<16x96xf32>
    %179 = vector.extract_strided_slice %178 {offsets = [0, 0], sizes = [16, 16], strides = [1, 1]} : vector<16x96xf32> to vector<16x16xf32>
    %180 = vector.extract_strided_slice %178 {offsets = [0, 32], sizes = [16, 16], strides = [1, 1]} : vector<16x96xf32> to vector<16x16xf32>
    %181 = vector.extract_strided_slice %178 {offsets = [0, 64], sizes = [16, 16], strides = [1, 1]} : vector<16x96xf32> to vector<16x16xf32>
    %182 = arith.truncf %179 : vector<16x16xf32> to vector<16x16xbf16>
    %183 = arith.truncf %180 : vector<16x16xf32> to vector<16x16xbf16>
    %cst_60 = arith.constant dense<0.000000e+00> : vector<16x16xf32>
    %184 = tpu.matmul %182, %183, %cst_60 {dimension_numbers = #tpu.dot_dimension_numbers<[1], [1], [0], [0], [0, 0, 1, 0], [], []>} : vector<16x16xbf16>, vector<16x16xbf16>, vector<16x16xf32> -> vector<16x16xf32>
    %cst_61 = arith.constant 2.500000e-01 : f32
    %185 = vector.broadcast %cst_61 : f32 to vector<16x16xf32>
    %186 = arith.mulf %184, %185 : vector<16x16xf32>
    %187 = arith.addf %186, %0 : vector<16x16xf32>
    %cst_62 = arith.constant dense<0xFF800000> : vector<16xf32>
    %188 = vector.multi_reduction <maximumf>, %187, %cst_62 [1] : vector<16x16xf32> to vector<16xf32>
    %189 = vector.shape_cast %188 : vector<16xf32> to vector<16x1xf32>
    %190 = vector.broadcast %189 : vector<16x1xf32> to vector<16x16xf32>
    %191 = arith.subf %187, %190 : vector<16x16xf32>
    %192 = math.exp %191 : vector<16x16xf32>
    %cst_63 = arith.constant dense<0.000000e+00> : vector<16xf32>
    %193 = vector.multi_reduction <add>, %192, %cst_63 [1] : vector<16x16xf32> to vector<16xf32>
    %194 = vector.shape_cast %193 : vector<16xf32> to vector<16x1xf32>
    %195 = tpu.reciprocal %194 {approx = true} : vector<16x1xf32> -> vector<16x1xf32>
    %196 = vector.broadcast %195 : vector<16x1xf32> to vector<16x16xf32>
    %197 = arith.mulf %192, %196 : vector<16x16xf32>
    %198 = arith.truncf %197 : vector<16x16xf32> to vector<16x16xbf16>
    %199 = arith.truncf %181 : vector<16x16xf32> to vector<16x16xbf16>
    %cst_64 = arith.constant dense<0.000000e+00> : vector<16x16xf32>
    %200 = tpu.matmul %198, %199, %cst_64 {dimension_numbers = #tpu.dot_dimension_numbers<[1], [0], [0], [1], [0, 0, 1, 1], [], []>} : vector<16x16xbf16>, vector<16x16xbf16>, vector<16x16xf32> -> vector<16x16xf32>
    %201 = vector.extract_strided_slice %178 {offsets = [0, 16], sizes = [16, 16], strides = [1, 1]} : vector<16x96xf32> to vector<16x16xf32>
    %202 = vector.extract_strided_slice %178 {offsets = [0, 48], sizes = [16, 16], strides = [1, 1]} : vector<16x96xf32> to vector<16x16xf32>
    %203 = vector.extract_strided_slice %178 {offsets = [0, 80], sizes = [16, 16], strides = [1, 1]} : vector<16x96xf32> to vector<16x16xf32>
    %204 = arith.truncf %201 : vector<16x16xf32> to vector<16x16xbf16>
    %205 = arith.truncf %202 : vector<16x16xf32> to vector<16x16xbf16>
    %cst_65 = arith.constant dense<0.000000e+00> : vector<16x16xf32>
    %206 = tpu.matmul %204, %205, %cst_65 {dimension_numbers = #tpu.dot_dimension_numbers<[1], [1], [0], [0], [0, 0, 1, 0], [], []>} : vector<16x16xbf16>, vector<16x16xbf16>, vector<16x16xf32> -> vector<16x16xf32>
    %cst_66 = arith.constant 2.500000e-01 : f32
    %207 = vector.broadcast %cst_66 : f32 to vector<16x16xf32>
    %208 = arith.mulf %206, %207 : vector<16x16xf32>
    %209 = arith.addf %208, %0 : vector<16x16xf32>
    %cst_67 = arith.constant dense<0xFF800000> : vector<16xf32>
    %210 = vector.multi_reduction <maximumf>, %209, %cst_67 [1] : vector<16x16xf32> to vector<16xf32>
    %211 = vector.shape_cast %210 : vector<16xf32> to vector<16x1xf32>
    %212 = vector.broadcast %211 : vector<16x1xf32> to vector<16x16xf32>
    %213 = arith.subf %209, %212 : vector<16x16xf32>
    %214 = math.exp %213 : vector<16x16xf32>
    %cst_68 = arith.constant dense<0.000000e+00> : vector<16xf32>
    %215 = vector.multi_reduction <add>, %214, %cst_68 [1] : vector<16x16xf32> to vector<16xf32>
    %216 = vector.shape_cast %215 : vector<16xf32> to vector<16x1xf32>
    %217 = tpu.reciprocal %216 {approx = true} : vector<16x1xf32> -> vector<16x1xf32>
    %218 = vector.broadcast %217 : vector<16x1xf32> to vector<16x16xf32>
    %219 = arith.mulf %214, %218 : vector<16x16xf32>
    %220 = arith.truncf %219 : vector<16x16xf32> to vector<16x16xbf16>
    %221 = arith.truncf %203 : vector<16x16xf32> to vector<16x16xbf16>
    %cst_69 = arith.constant dense<0.000000e+00> : vector<16x16xf32>
    %222 = tpu.matmul %220, %221, %cst_69 {dimension_numbers = #tpu.dot_dimension_numbers<[1], [0], [0], [1], [0, 0, 1, 1], [], []>} : vector<16x16xbf16>, vector<16x16xbf16>, vector<16x16xf32> -> vector<16x16xf32>
    %223 = tpu.concatenate %200, %222 in 1 : vector<16x16xf32>, vector<16x16xf32> -> vector<16x32xf32>
    %c1_70 = arith.constant 1 : index
    %c0_71 = arith.constant 0 : index
    %c0_72 = arith.constant 0 : index
    %224 = vector.load %arg5[%c1_70, %c0_71, %c0_72] : memref<2x32x32xbf16, #tpu.memory_space<vmem>>, vector<1x32x32xbf16>
    %225 = vector.shape_cast %224 : vector<1x32x32xbf16> to vector<32x32xbf16>
    %226 = arith.truncf %223 : vector<16x32xf32> to vector<16x32xbf16>
    %cst_73 = arith.constant dense<0.000000e+00> : vector<16x32xf32>
    %227 = tpu.matmul %226, %225, %cst_73 {dimension_numbers = #tpu.dot_dimension_numbers<[1], [0], [0], [1], [0, 0, 1, 1], [], []>} : vector<16x32xbf16>, vector<32x32xbf16>, vector<16x32xf32> -> vector<16x32xf32>
    %228 = vector.extract_strided_slice %171 {offsets = [1, 0], sizes = [1, 32], strides = [1, 1]} : vector<8x128xf32> to vector<1x32xf32>
    %229 = vector.broadcast %228 : vector<1x32xf32> to vector<16x32xf32>
    %230 = arith.addf %227, %229 : vector<16x32xf32>
    %231 = arith.addf %230, %169 : vector<16x32xf32>
    %232 = vector.extract_strided_slice %171 {offsets = [2, 0], sizes = [1, 32], strides = [1, 1]} : vector<8x128xf32> to vector<1x32xf32>
    %233 = vector.extract_strided_slice %171 {offsets = [3, 0], sizes = [1, 32], strides = [1, 1]} : vector<8x128xf32> to vector<1x32xf32>
    %cst_74 = arith.constant dense<0.000000e+00> : vector<16xf32>
    %234 = vector.multi_reduction <add>, %231, %cst_74 [1] : vector<16x32xf32> to vector<16xf32>
    %235 = vector.shape_cast %234 : vector<16xf32> to vector<16x1xf32>
    %cst_75 = arith.constant 3.200000e+01 : f32
    %236 = vector.broadcast %cst_75 : f32 to vector<16x1xf32>
    %237 = arith.divf %235, %236 : vector<16x1xf32>
    %238 = vector.broadcast %237 : vector<16x1xf32> to vector<16x32xf32>
    %239 = arith.subf %231, %238 : vector<16x32xf32>
    %240 = vector.broadcast %237 : vector<16x1xf32> to vector<16x32xf32>
    %241 = arith.subf %231, %240 : vector<16x32xf32>
    %242 = arith.mulf %239, %241 : vector<16x32xf32>
    %cst_76 = arith.constant dense<0.000000e+00> : vector<16xf32>
    %243 = vector.multi_reduction <add>, %242, %cst_76 [1] : vector<16x32xf32> to vector<16xf32>
    %244 = vector.shape_cast %243 : vector<16xf32> to vector<16x1xf32>
    %cst_77 = arith.constant 3.200000e+01 : f32
    %245 = vector.broadcast %cst_77 : f32 to vector<16x1xf32>
    %246 = arith.divf %244, %245 : vector<16x1xf32>
    %247 = vector.broadcast %237 : vector<16x1xf32> to vector<16x32xf32>
    %248 = arith.subf %231, %247 : vector<16x32xf32>
    %cst_78 = arith.constant 9.99999996E-13 : f32
    %249 = vector.broadcast %cst_78 : f32 to vector<16x1xf32>
    %250 = arith.addf %246, %249 : vector<16x1xf32>
    %251 = math.rsqrt %250 : vector<16x1xf32>
    %252 = vector.broadcast %251 : vector<16x1xf32> to vector<16x32xf32>
    %253 = arith.mulf %248, %252 : vector<16x32xf32>
    %254 = vector.broadcast %232 : vector<1x32xf32> to vector<16x32xf32>
    %255 = arith.mulf %253, %254 : vector<16x32xf32>
    %256 = vector.broadcast %233 : vector<1x32xf32> to vector<16x32xf32>
    %257 = arith.addf %255, %256 : vector<16x32xf32>
    %c1_79 = arith.constant 1 : index
    %c0_80 = arith.constant 0 : index
    %c0_81 = arith.constant 0 : index
    %258 = vector.load %arg6[%c1_79, %c0_80, %c0_81] : memref<2x32x64xbf16, #tpu.memory_space<vmem>>, vector<1x32x64xbf16>
    %259 = vector.shape_cast %258 : vector<1x32x64xbf16> to vector<32x64xbf16>
    %260 = arith.truncf %257 : vector<16x32xf32> to vector<16x32xbf16>
    %cst_82 = arith.constant dense<0.000000e+00> : vector<16x64xf32>
    %261 = tpu.matmul %260, %259, %cst_82 {dimension_numbers = #tpu.dot_dimension_numbers<[1], [0], [0], [1], [0, 0, 1, 1], [], []>} : vector<16x32xbf16>, vector<32x64xbf16>, vector<16x64xf32> -> vector<16x64xf32>
    %262 = vector.extract_strided_slice %171 {offsets = [4, 0], sizes = [1, 64], strides = [1, 1]} : vector<8x128xf32> to vector<1x64xf32>
    %263 = vector.broadcast %262 : vector<1x64xf32> to vector<16x64xf32>
    %264 = arith.addf %261, %263 : vector<16x64xf32>
    %cst_83 = arith.constant 5.000000e-01 : f32
    %265 = vector.broadcast %cst_83 : f32 to vector<16x64xf32>
    %266 = arith.mulf %265, %264 : vector<16x64xf32>
    %cst_84 = arith.constant 4.471500e-02 : f32
    %267 = vector.broadcast %cst_84 : f32 to vector<16x64xf32>
    %268 = arith.mulf %267, %264 : vector<16x64xf32>
    %269 = arith.mulf %268, %264 : vector<16x64xf32>
    %270 = arith.mulf %269, %264 : vector<16x64xf32>
    %271 = arith.addf %264, %270 : vector<16x64xf32>
    %cst_85 = arith.constant 0.797884583 : f32
    %272 = vector.broadcast %cst_85 : f32 to vector<16x64xf32>
    %273 = arith.mulf %272, %271 : vector<16x64xf32>
    %274 = math.tanh %273 : vector<16x64xf32>
    %cst_86 = arith.constant 1.000000e+00 : f32
    %275 = vector.broadcast %cst_86 : f32 to vector<16x64xf32>
    %276 = arith.addf %275, %274 : vector<16x64xf32>
    %277 = arith.mulf %266, %276 : vector<16x64xf32>
    %c1_87 = arith.constant 1 : index
    %c0_88 = arith.constant 0 : index
    %c0_89 = arith.constant 0 : index
    %278 = vector.load %arg7[%c1_87, %c0_88, %c0_89] : memref<2x64x32xbf16, #tpu.memory_space<vmem>>, vector<1x64x32xbf16>
    %279 = vector.shape_cast %278 : vector<1x64x32xbf16> to vector<64x32xbf16>
    %280 = arith.truncf %277 : vector<16x64xf32> to vector<16x64xbf16>
    %cst_90 = arith.constant dense<0.000000e+00> : vector<16x32xf32>
    %281 = tpu.matmul %280, %279, %cst_90 {dimension_numbers = #tpu.dot_dimension_numbers<[1], [0], [0], [1], [0, 0, 1, 1], [], []>} : vector<16x64xbf16>, vector<64x32xbf16>, vector<16x32xf32> -> vector<16x32xf32>
    %282 = vector.extract_strided_slice %171 {offsets = [5, 0], sizes = [1, 32], strides = [1, 1]} : vector<8x128xf32> to vector<1x32xf32>
    %283 = vector.broadcast %282 : vector<1x32xf32> to vector<16x32xf32>
    %284 = arith.addf %281, %283 : vector<16x32xf32>
    %285 = arith.addf %284, %257 : vector<16x32xf32>
    %286 = vector.extract_strided_slice %171 {offsets = [6, 0], sizes = [1, 32], strides = [1, 1]} : vector<8x128xf32> to vector<1x32xf32>
    %287 = vector.extract_strided_slice %171 {offsets = [7, 0], sizes = [1, 32], strides = [1, 1]} : vector<8x128xf32> to vector<1x32xf32>
    %cst_91 = arith.constant dense<0.000000e+00> : vector<16xf32>
    %288 = vector.multi_reduction <add>, %285, %cst_91 [1] : vector<16x32xf32> to vector<16xf32>
    %289 = vector.shape_cast %288 : vector<16xf32> to vector<16x1xf32>
    %cst_92 = arith.constant 3.200000e+01 : f32
    %290 = vector.broadcast %cst_92 : f32 to vector<16x1xf32>
    %291 = arith.divf %289, %290 : vector<16x1xf32>
    %292 = vector.broadcast %291 : vector<16x1xf32> to vector<16x32xf32>
    %293 = arith.subf %285, %292 : vector<16x32xf32>
    %294 = vector.broadcast %291 : vector<16x1xf32> to vector<16x32xf32>
    %295 = arith.subf %285, %294 : vector<16x32xf32>
    %296 = arith.mulf %293, %295 : vector<16x32xf32>
    %cst_93 = arith.constant dense<0.000000e+00> : vector<16xf32>
    %297 = vector.multi_reduction <add>, %296, %cst_93 [1] : vector<16x32xf32> to vector<16xf32>
    %298 = vector.shape_cast %297 : vector<16xf32> to vector<16x1xf32>
    %cst_94 = arith.constant 3.200000e+01 : f32
    %299 = vector.broadcast %cst_94 : f32 to vector<16x1xf32>
    %300 = arith.divf %298, %299 : vector<16x1xf32>
    %301 = vector.broadcast %291 : vector<16x1xf32> to vector<16x32xf32>
    %302 = arith.subf %285, %301 : vector<16x32xf32>
    %cst_95 = arith.constant 9.99999996E-13 : f32
    %303 = vector.broadcast %cst_95 : f32 to vector<16x1xf32>
    %304 = arith.addf %300, %303 : vector<16x1xf32>
    %305 = math.rsqrt %304 : vector<16x1xf32>
    %306 = vector.broadcast %305 : vector<16x1xf32> to vector<16x32xf32>
    %307 = arith.mulf %302, %306 : vector<16x32xf32>
    %308 = vector.broadcast %286 : vector<1x32xf32> to vector<16x32xf32>
    %309 = arith.mulf %307, %308 : vector<16x32xf32>
    %310 = vector.broadcast %287 : vector<1x32xf32> to vector<16x32xf32>
    %311 = arith.addf %309, %310 : vector<16x32xf32>
    %312 = tpu.iota {dimensions = array<i32: 1>} : vector<2x16xi32>
    %313 = tpu.iota {dimensions = array<i32: 0>} : vector<2x16xi32>
    %c8_i32 = arith.constant 8 : i32
    %314 = vector.broadcast %c8_i32 : i32 to vector<2x16xi32>
    %315 = arith.muli %313, %314 : vector<2x16xi32>
    %316 = arith.cmpi eq, %312, %315 : vector<2x16xi32>
    %317 = arith.extui %316 : vector<2x16xi1> to vector<2x16xi32>
    %318 = arith.sitofp %317 : vector<2x16xi32> to vector<2x16xf32>
    %cst_96 = arith.constant dense<0.000000e+00> : vector<2x32xf32>
    %319 = tpu.matmul %318, %311, %cst_96 {dimension_numbers = #tpu.dot_dimension_numbers<[1], [0], [0], [1], [0, 0, 1, 1], [], []>} : vector<2x16xf32>, vector<16x32xf32>, vector<2x32xf32> -> vector<2x32xf32>
    %c0_97 = arith.constant 0 : index
    %c0_98 = arith.constant 0 : index
    %320 = vector.load %arg8[%c0_97, %c0_98] : memref<32x32xbf16, #tpu.memory_space<vmem>>, vector<32x32xbf16>
    %321 = arith.truncf %319 : vector<2x32xf32> to vector<2x32xbf16>
    %cst_99 = arith.constant dense<0.000000e+00> : vector<2x32xf32>
    %322 = tpu.matmul %321, %320, %cst_99 {dimension_numbers = #tpu.dot_dimension_numbers<[1], [0], [0], [1], [0, 0, 1, 1], [], []>} : vector<2x32xbf16>, vector<32x32xbf16>, vector<2x32xf32> -> vector<2x32xf32>
    %c2 = arith.constant 2 : index
    %c0_100 = arith.constant 0 : index
    %323 = vector.load %arg3[%c2, %c0_100] : memref<4x32xf32, #tpu.memory_space<vmem>>, vector<1x32xf32>
    %324 = vector.broadcast %323 : vector<1x32xf32> to vector<2x32xf32>
    %325 = arith.addf %322, %324 : vector<2x32xf32>
    %326 = math.tanh %325 : vector<2x32xf32>
    %c0_101 = arith.constant 0 : index
    %c0_102 = arith.constant 0 : index
    %327 = vector.load %arg9[%c0_101, %c0_102] : memref<32x2xbf16, #tpu.memory_space<vmem>>, vector<32x2xbf16>
    %328 = arith.truncf %326 : vector<2x32xf32> to vector<2x32xbf16>
    %cst_103 = arith.constant dense<0.000000e+00> : vector<2x2xf32>
    %329 = tpu.matmul %328, %327, %cst_103 {dimension_numbers = #tpu.dot_dimension_numbers<[1], [0], [0], [1], [0, 0, 1, 1], [], []>} : vector<2x32xbf16>, vector<32x2xbf16>, vector<2x2xf32> -> vector<2x2xf32>
    %c3 = arith.constant 3 : index
    %c0_104 = arith.constant 0 : index
    %330 = vector.load %arg3[%c3, %c0_104] : memref<4x32xf32, #tpu.memory_space<vmem>>, vector<1x2xf32>
    %331 = vector.broadcast %330 : vector<1x2xf32> to vector<2x2xf32>
    %332 = arith.addf %329, %331 : vector<2x2xf32>
    %c0_105 = arith.constant 0 : index
    %c0_106 = arith.constant 0 : index
    %333 = vector.load %arg10[%c0_105, %c0_106] : memref<2x2xf32, #tpu.memory_space<vmem>>, vector<2x2xf32>
    tpu.vector_store %arg10[%c0_105, %c0_106], %332 {strides = array<i32>} : memref<2x2xf32, #tpu.memory_space<vmem>>, vector<2x2xf32>,
    return
  }
}

</mosaic_0001>

<llo_original>
// kernel: text_classifier_forward.1
$region0: #{text_classifier_forward.1}
  #allocation0 [shape = 'u32[]', space=smem, size = 0x4, offset = 0x4, fixed_abs, tag = 'smem constant byte address 0x4 - core index']
  #allocation1 [shape = 'u32[144,128]{1,0:T(1,128)}', space=vmem, size = 0x12000, scoped, tag = 'internal scratch']
  %s0 = inlined_call_operand.vmem [shape: f32[16,32], index: 0, kind: input, shape index: {}]
  %s1 = inlined_call_operand.vmem [shape: f32[16,16], index: 1, kind: input, shape index: {}]
  %s2 = inlined_call_operand.vmem [shape: f32[2,8,128], index: 2, kind: input, shape index: {}]
  %s3 = inlined_call_operand.vmem [shape: f32[4,32], index: 3, kind: input, shape index: {}]
  %s4 = inlined_call_operand.vmem [shape: bf16[2,32,96], index: 4, kind: input, shape index: {}]
  %s5 = inlined_call_operand.vmem [shape: bf16[2,32,32], index: 5, kind: input, shape index: {}]
  %s6 = inlined_call_operand.vmem [shape: bf16[2,32,64], index: 6, kind: input, shape index: {}]
  %s7 = inlined_call_operand.vmem [shape: bf16[2,64,32], index: 7, kind: input, shape index: {}]
  %s8 = inlined_call_operand.vmem [shape: bf16[32,32], index: 8, kind: input, shape index: {}]
  %s9 = inlined_call_operand.vmem [shape: bf16[32,2], index: 9, kind: input, shape index: {}]
  %s10 = inlined_call_operand.hbm [shape: f32[2,2], index: 10, kind: output, shape index: {}]
  %s11 = sld [smem:[#allocation0]]
  $region50: #{text_classifier_forward.1} parent=0
    _
  %s13 = ssub.s32 1, %s11
  %s14 = scalar_select 0, %s13, %s11
  $region1: #{text_classifier_forward.1} parent=0
    #allocation2 [shape = 'u8[1024]{0}', space=vmem, size = 0x400, scoped, tag = 'output window, operand 0, single buffered']
    #allocation3 [shape = 's32[1]{0}', space=sflag, size = 0x4, scoped, tag = 'scoped memory for text_classifier_forward.1']
    %15 = vsyncpa [#allocation3], 0
    // Predicated region
    $region2: #{text_classifier_forward.1} parent=1 // pred_check
      _
    $region3: #{text_classifier_forward.1} parent=1 // pred_check_branch
      %17 = sbr.rel (0) target = $region5
    $region4: #{text_classifier_forward.1} parent=1 // pred_region
      _
    $region5: #{text_classifier_forward.1} parent=1 // pred_fallthru
      _
    // Predicated region
    $region6: #{text_classifier_forward.1} parent=1 // pred_check
      _
    $region7: #{text_classifier_forward.1} parent=1 // pred_check_branch
      %19 = sbr.rel (0) target = $region9
    $region8: #{text_classifier_forward.1} parent=1 // pred_region
      _
    $region9: #{text_classifier_forward.1} parent=1 // pred_fallthru
      _
    // Predicated region
    $region10: #{text_classifier_forward.1} parent=1 // pred_check
      _
    $region11: #{text_classifier_forward.1} parent=1 // pred_check_branch
      %21 = sbr.rel (0) target = $region13
    $region12: #{text_classifier_forward.1} parent=1 // pred_region
      _
    $region13: #{text_classifier_forward.1} parent=1 // pred_fallthru
      _
    // Predicated region
    $region14: #{text_classifier_forward.1} parent=1 // pred_check
      _
    $region15: #{text_classifier_forward.1} parent=1 // pred_check_branch
      %23 = sbr.rel (0) target = $region17
    $region16: #{text_classifier_forward.1} parent=1 // pred_region
      _
    $region17: #{text_classifier_forward.1} parent=1 // pred_fallthru
      _
    // Predicated region
    $region18: #{text_classifier_forward.1} parent=1 // pred_check
      _
    $region19: #{text_classifier_forward.1} parent=1 // pred_check_branch
      %25 = sbr.rel (0) target = $region21
    $region20: #{text_classifier_forward.1} parent=1 // pred_region
      _
    $region21: #{text_classifier_forward.1} parent=1 // pred_fallthru
      _
    // Predicated region
    $region22: #{text_classifier_forward.1} parent=1 // pred_check
      _
    $region23: #{text_classifier_forward.1} parent=1 // pred_check_branch
      %27 = sbr.rel (0) target = $region25
    $region24: #{text_classifier_forward.1} parent=1 // pred_region
      _
    $region25: #{text_classifier_forward.1} parent=1 // pred_fallthru
      _
    // Predicated region
    $region26: #{text_classifier_forward.1} parent=1 // pred_check
      _
    $region27: #{text_classifier_forward.1} parent=1 // pred_check_branch
      %29 = sbr.rel (0) target = $region29
    $region28: #{text_classifier_forward.1} parent=1 // pred_region
      _
    $region29: #{text_classifier_forward.1} parent=1 // pred_fallthru
      _
    // Predicated region
    $region30: #{text_classifier_forward.1} parent=1 // pred_check
      _
    $region31: #{text_classifier_forward.1} parent=1 // pred_check_branch
      %31 = sbr.rel (0) target = $region33
    $region32: #{text_classifier_forward.1} parent=1 // pred_region
      _
    $region33: #{text_classifier_forward.1} parent=1 // pred_fallthru
      _
    // Predicated region
    $region34: #{text_classifier_forward.1} parent=1 // pred_check
      _
    $region35: #{text_classifier_forward.1} parent=1 // pred_check_branch
      %33 = sbr.rel (0) target = $region37
    $region36: #{text_classifier_forward.1} parent=1 // pred_region
      _
    $region37: #{text_classifier_forward.1} parent=1 // pred_fallthru
      _
    // Predicated region
    $region38: #{text_classifier_forward.1} parent=1 // pred_check
      _
    $region39: #{text_classifier_forward.1} parent=1 // pred_check_branch
      %35 = sbr.rel (0) target = $region41
    $region40: #{text_classifier_forward.1} parent=1 // pred_region
      _
    $region41: #{text_classifier_forward.1} parent=1 // pred_fallthru
      _
    %v37 = vld [vmem:[%s1] sm:$0xff]
    %v38 = vld [vmem:[%s1 + $0x8] sm:$0xff]
    %v39 = vld [vmem:[%s0] sm:$0xff]
    %v40 = vld [vmem:[%s0 + $0x8] sm:$0xff]
    %v41 = vld [vmem:[%s3] sm:$0x1]
    %v42 = vld [vmem:[%s3 + $0x1] sm:$0x1]
    %vm43 = vcmask 261120
    %v44 = vsel %vm43, %v39, 0.0
    %45 = vadd.xlane.f32.xlu0 %v44
    %v46 = vpop.xlane.xlu0 %45
    %v47 = vsel %vm43, %v40, 0.0
    %48 = vadd.xlane.f32.xlu0 %v47
    %v49 = vpop.xlane.xlu0 %48
    %v50 = vrcp.pop 32.0
    %v51 = vmul.f32 %v46, %v50
    %v52 = vmul.f32 %v49, %v50
    %v53 = vsub.f32 %v39, %v51
    %v54 = vsub.f32 %v40, %v52
    %v55 = vmul.f32 %v53, %v53
    %v56 = vmul.f32 %v54, %v54
    %v57 = vsel %vm43, %v55, 0.0
    %58 = vadd.xlane.f32.xlu0 %v57
    %v59 = vpop.xlane.xlu0 %58
    %v60 = vsel %vm43, %v56, 0.0
    %61 = vadd.xlane.f32.xlu0 %v60
    %v62 = vpop.xlane.xlu0 %61
    %v63 = vmul.f32 %v59, %v50
    %v64 = vmul.f32 %v62, %v50
    %v65 = vadd.f32 %v63, 1e-12
    %v66 = vadd.f32 %v64, 1e-12
    %v67 = vrsqrt.pop %v65
    %v68 = vrsqrt.pop %v66
    %v69 = vmul.f32 %v53, %v67
    %v70 = vmul.f32 %v54, %v68
    %v71 = vlaneseq
    %v72 = vshrl.u32 %v71, 7
    %v73 = vsub.s32 0, %v72
    %v74 = vrot.slane %v41, %v73
    %v75 = vmul.f32 %v69, %v74
    %v76 = vmul.f32 %v70, %v74
    %v77 = vlaneseq
    %v78 = vshrl.u32 %v77, 7
    %v79 = vsub.s32 0, %v78
    %v80 = vrot.slane %v42, %v79
    %v81 = vadd.f32 %v75, %v80
    %v82 = vadd.f32 %v76, %v80
    %v83 = vld [vmem:[%s2] sm:$0xff]
    %v84 = vld [vmem:[%s4] sm:$0xf]
    %v85 = vld [vmem:[%s4 + $0x4] sm:$0xf]
    %v86 = vld [vmem:[%s4 + $0x8] sm:$0xf]
    %v87 = vld [vmem:[%s4 + $0xc] sm:$0xf]
    %v88 = vpack.c.bf16 %v82, %v81
    %v89 = vlaneseq
    %v90 = vshrl.u32 %v89, 7
    %v91 = vsub.s32 0, %v90
    %v92 = vrot.slane %v83, %v91
    %v97 = vunpack.c.l.b16 %v84
    %v98 = vunpack.c.l.b16 %v85
    %v99 = vunpack.c.l.b16 %v86
    %v100 = vunpack.c.l.b16 %v87
    %v101 = vpack.c.b16 %v98, %v97
    %v102 = vpack.c.b16 %v100, %v99
    %v106 = vsel %vm43, %v88, 0
    %108 = vmatprep.subr.bf16.mxu0 0
    %109 = vmatpush1.bf16.msra.mxu0 %v101
    %110 = vmatprep.subr.bf16.mxu0 0
    %111 = vmatpush1.bf16.msra.mxu0 %v102
    %112 = vmatprep.subr.bf16.mxu0 0
    %113 = vmatpush1.bf16.msra.mxu0 0
    %114 = vmatprep.subr.bf16.mxu0 0
    %115 = vmatpush1.bf16.msra.mxu0 0
    %116 = vmatprep.subr.bf16.mxu0 0
    %117 = vmatpush1.bf16.msra.mxu0 0
    %118 = vmatprep.subr.bf16.mxu0 0
    %119 = vmatpush1.bf16.msra.mxu0 0
    %120 = vmatprep.subr.bf16.mxu0 0
    %121 = vmatpush1.bf16.msra.mxu0 0
    %122 = vmatprep.subr.bf16.mxu0 0
    %123 = vmatpush1.bf16.msra.mxu0 0
    %124 = vmatprep.subr.bf16.mxu0 0
    %125 = vmatpush1.bf16.msra.mxu0 0
    %126 = vmatprep.subr.bf16.mxu0 0
    %127 = vmatpush1.bf16.msra.mxu0 0
    %128 = vmatprep.subr.bf16.mxu0 0
    %129 = vmatpush1.bf16.msra.mxu0 0
    %130 = vmatprep.subr.bf16.mxu0 0
    %131 = vmatpush1.bf16.msra.mxu0 0
    %132 = vmatprep.subr.bf16.mxu0 0
    %133 = vmatpush1.bf16.msra.mxu0 0
    %134 = vmatprep.subr.bf16.mxu0 0
    %135 = vmatpush1.bf16.msra.mxu0 0
    %136 = vmatprep.subr.bf16.mxu0 0
    %137 = vmatpush1.bf16.msra.mxu0 0
    %138 = vmatprep.subr.bf16.mxu0 0
    %139 = vmatpush1.bf16.msra.mxu0 0
    %140 = vmatprep.mubr.bf16.mxu0 0
    %141 = vmatmul.mubr.bf16.gmra.mrb[0].mxu0 %v106
    %v142 = vpop.f32.mrb[0].mxu0
    %v143 = vadd.f32 %v92, %v142
    %v144 = vpop.f32.mrb[0].mxu0
    %v145 = vpop.f32.mrb[0].mxu0
    %v146 = vadd.f32 %v92, %v145
    %v147 = vpop.f32.mrb[0].mxu0
    %148 = vdwg.mxu0
    %v149 = vpack.c.bf16 %v146, %v143
    %151 = vrot.lane.b32.xlu0 %v149, 96
    %v152 = vpop.permute.xlu0 %151
    %vm153 = vcmask 130048
    %v155 = vsel %vm153, %v149, 0
    %v158 = vsel %vm153, %v152, 0
    %160 = vmatprep.subr.bf16.mxu0 0
    %161 = vmatpush1.bf16.xpose.msra.mxu0 %v158
    %162 = vmatprep.subr.bf16.mxu0 0
    %163 = vmatpush1.bf16.xpose.msra.mxu0 0
    %164 = vmatprep.subr.bf16.mxu0 0
    %165 = vmatpush1.bf16.xpose.msra.mxu0 0
    %166 = vmatprep.subr.bf16.mxu0 0
    %167 = vmatpush1.bf16.xpose.msra.mxu0 0
    %168 = vmatprep.subr.bf16.mxu0 0
    %169 = vmatpush1.bf16.xpose.msra.mxu0 0
    %170 = vmatprep.subr.bf16.mxu0 0
    %171 = vmatpush1.bf16.xpose.msra.mxu0 0
    %172 = vmatprep.subr.bf16.mxu0 0
    %173 = vmatpush1.bf16.xpose.msra.mxu0 0
    %174 = vmatprep.subr.bf16.mxu0 0
    %175 = vmatpush1.bf16.xpose.msra.mxu0 0
    %176 = vmatprep.subr.bf16.mxu0 0
    %177 = vmatpush1.bf16.xpose.msra.mxu0 0
    %178 = vmatprep.subr.bf16.mxu0 0
    %179 = vmatpush1.bf16.xpose.msra.mxu0 0
    %180 = vmatprep.subr.bf16.mxu0 0
    %181 = vmatpush1.bf16.xpose.msra.mxu0 0
    %182 = vmatprep.subr.bf16.mxu0 0
    %183 = vmatpush1.bf16.xpose.msra.mxu0 0
    %184 = vmatprep.subr.bf16.mxu0 0
    %185 = vmatpush1.bf16.xpose.msra.mxu0 0
    %186 = vmatprep.subr.bf16.mxu0 0
    %187 = vmatpush1.bf16.xpose.msra.mxu0 0
    %188 = vmatprep.subr.bf16.mxu0 0
    %189 = vmatpush1.bf16.xpose.msra.mxu0 0
    %190 = vmatprep.subr.bf16.mxu0 0
    %191 = vmatpush1.bf16.xpose.msra.mxu0 0
    %192 = vmatprep.mubr.bf16.mxu0 0
    %193 = vmatmul.mubr.bf16.gmra.mrb[0].mxu0 %v155
    %v194 = vpop.f32.mrb[0].mxu0
    %v195 = vadd.f32 0.0, %v194
    %v196 = vpop.f32.mrb[0].mxu0
    %v197 = vpop.f32.mrb[0].mxu0
    %v198 = vadd.f32 0.0, %v197
    %v199 = vpop.f32.mrb[0].mxu0
    %200 = vdwg.mxu0
    %v201 = vmul.f32 %v195, 0.25
    %v202 = vmul.f32 %v198, 0.25
    %v203 = vadd.f32 %v201, %v37
    %v204 = vadd.f32 %v202, %v38
    %v205 = vsel %vm153, %v203, -inf
    %206 = vmax.xlane.f32.xlu0 %v205
    %v207 = vpop.xlane.xlu0 %206
    %v208 = vsel %vm153, %v204, -inf
    %209 = vmax.xlane.f32.xlu0 %v208
    %v210 = vpop.xlane.xlu0 %209
    %v211 = vsub.f32 %v203, %v207
    %v212 = vsub.f32 %v204, %v210
    %v213 = vmul.f32 %v211, 1.442695
    %v214 = vpow.pop %v213
    %v215 = vmul.f32 %v212, 1.442695
    %v216 = vpow.pop %v215
    %v217 = vsel %vm153, %v214, 0.0
    %218 = vadd.xlane.f32.xlu0 %v217
    %v219 = vpop.xlane.xlu0 %218
    %v220 = vsel %vm153, %v216, 0.0
    %221 = vadd.xlane.f32.xlu0 %v220
    %v222 = vpop.xlane.xlu0 %221
    %v223 = vrcp.pop %v219
    %v224 = vrcp.pop %v222
    %v225 = vmul.f32 %v214, %v223
    %v226 = vmul.f32 %v216, %v224
    %v227 = vpack.c.bf16 %v226, %v225
    %228 = vrot.lane.b32.xlu0 %v149, 64
    %v229 = vpop.permute.xlu0 %228
    %v232 = vsel %vm153, %v227, 0
    %234 = vmatprep.subr.bf16.mxu0 0
    %235 = vmatpush1.bf16.msra.mxu0 %v229
    %236 = vmatprep.subr.bf16.mxu0 0
    %237 = vmatpush1.bf16.msra.mxu0 0
    %238 = vmatprep.subr.bf16.mxu0 0
    %239 = vmatpush1.bf16.msra.mxu0 0
    %240 = vmatprep.subr.bf16.mxu0 0
    %241 = vmatpush1.bf16.msra.mxu0 0
    %242 = vmatprep.subr.bf16.mxu0 0
    %243 = vmatpush1.bf16.msra.mxu0 0
    %244 = vmatprep.subr.bf16.mxu0 0
    %245 = vmatpush1.bf16.msra.mxu0 0
    %246 = vmatprep.subr.bf16.mxu0 0
    %247 = vmatpush1.bf16.msra.mxu0 0
    %248 = vmatprep.subr.bf16.mxu0 0
    %249 = vmatpush1.bf16.msra.mxu0 0
    %250 = vmatprep.subr.bf16.mxu0 0
    %251 = vmatpush1.bf16.msra.mxu0 0
    %252 = vmatprep.subr.bf16.mxu0 0
    %253 = vmatpush1.bf16.msra.mxu0 0
    %254 = vmatprep.subr.bf16.mxu0 0
    %255 = vmatpush1.bf16.msra.mxu0 0
    %256 = vmatprep.subr.bf16.mxu0 0
    %257 = vmatpush1.bf16.msra.mxu0 0
    %258 = vmatprep.subr.bf16.mxu0 0
    %259 = vmatpush1.bf16.msra.mxu0 0
    %260 = vmatprep.subr.bf16.mxu0 0
    %261 = vmatpush1.bf16.msra.mxu0 0
    %262 = vmatprep.subr.bf16.mxu0 0
    %263 = vmatpush1.bf16.msra.mxu0 0
    %264 = vmatprep.subr.bf16.mxu0 0
    %265 = vmatpush1.bf16.msra.mxu0 0
    %266 = vmatprep.mubr.bf16.mxu0 0
    %267 = vmatmul.mubr.bf16.gmra.mrb[0].mxu0 %v232
    %v268 = vpop.f32.mrb[0].mxu0
    %v269 = vadd.f32 0.0, %v268
    %v270 = vpop.f32.mrb[0].mxu0
    %v271 = vpop.f32.mrb[0].mxu0
    %v272 = vadd.f32 0.0, %v271
    %v273 = vpop.f32.mrb[0].mxu0
    %274 = vdwg.mxu0
    %275 = vrot.lane.b32.xlu0 %v149, 112
    %v276 = vpop.permute.xlu0 %275
    %277 = vrot.lane.b32.xlu0 %v149, 80
    %v278 = vpop.permute.xlu0 %277
    %v280 = vsel %vm153, %v276, 0
    %v283 = vsel %vm153, %v278, 0
    %285 = vmatprep.subr.bf16.mxu0 0
    %286 = vmatpush1.bf16.xpose.msra.mxu0 %v283
    %287 = vmatprep.subr.bf16.mxu0 0
    %288 = vmatpush1.bf16.xpose.msra.mxu0 0
    %289 = vmatprep.subr.bf16.mxu0 0
    %290 = vmatpush1.bf16.xpose.msra.mxu0 0
    %291 = vmatprep.subr.bf16.mxu0 0
    %292 = vmatpush1.bf16.xpose.msra.mxu0 0
    %293 = vmatprep.subr.bf16.mxu0 0
    %294 = vmatpush1.bf16.xpose.msra.mxu0 0
    %295 = vmatprep.subr.bf16.mxu0 0
    %296 = vmatpush1.bf16.xpose.msra.mxu0 0
    %297 = vmatprep.subr.bf16.mxu0 0
    %298 = vmatpush1.bf16.xpose.msra.mxu0 0
    %299 = vmatprep.subr.bf16.mxu0 0
    %300 = vmatpush1.bf16.xpose.msra.mxu0 0
    %301 = vmatprep.subr.bf16.mxu0 0
    %302 = vmatpush1.bf16.xpose.msra.mxu0 0
    %303 = vmatprep.subr.bf16.mxu0 0
    %304 = vmatpush1.bf16.xpose.msra.mxu0 0
    %305 = vmatprep.subr.bf16.mxu0 0
    %306 = vmatpush1.bf16.xpose.msra.mxu0 0
    %307 = vmatprep.subr.bf16.mxu0 0
    %308 = vmatpush1.bf16.xpose.msra.mxu0 0
    %309 = vmatprep.subr.bf16.mxu0 0
    %310 = vmatpush1.bf16.xpose.msra.mxu0 0
    %311 = vmatprep.subr.bf16.mxu0 0
    %312 = vmatpush1.bf16.xpose.msra.mxu0 0
    %313 = vmatprep.subr.bf16.mxu0 0
    %314 = vmatpush1.bf16.xpose.msra.mxu0 0
    %315 = vmatprep.subr.bf16.mxu0 0
    %316 = vmatpush1.bf16.xpose.msra.mxu0 0
    %317 = vmatprep.mubr.bf16.mxu0 0
    %318 = vmatmul.mubr.bf16.gmra.mrb[0].mxu0 %v280
    %v319 = vpop.f32.mrb[0].mxu0
    %v320 = vadd.f32 0.0, %v319
    %v321 = vpop.f32.mrb[0].mxu0
    %v322 = vpop.f32.mrb[0].mxu0
    %v323 = vadd.f32 0.0, %v322
    %v324 = vpop.f32.mrb[0].mxu0
    %325 = vdwg.mxu0
    %v326 = vmul.f32 %v320, 0.25
    %v327 = vmul.f32 %v323, 0.25
    %v328 = vadd.f32 %v326, %v37
    %v329 = vadd.f32 %v327, %v38
    %v330 = vsel %vm153, %v328, -inf
    %331 = vmax.xlane.f32.xlu0 %v330
    %v332 = vpop.xlane.xlu0 %331
    %v333 = vsel %vm153, %v329, -inf
    %334 = vmax.xlane.f32.xlu0 %v333
    %v335 = vpop.xlane.xlu0 %334
    %v336 = vsub.f32 %v328, %v332
    %v337 = vsub.f32 %v329, %v335
    %v338 = vmul.f32 %v336, 1.442695
    %v339 = vpow.pop %v338
    %v340 = vmul.f32 %v337, 1.442695
    %v341 = vpow.pop %v340
    %v342 = vsel %vm153, %v339, 0.0
    %343 = vadd.xlane.f32.xlu0 %v342
    %v344 = vpop.xlane.xlu0 %343
    %v345 = vsel %vm153, %v341, 0.0
    %346 = vadd.xlane.f32.xlu0 %v345
    %v347 = vpop.xlane.xlu0 %346
    %v348 = vrcp.pop %v344
    %v349 = vrcp.pop %v347
    %v350 = vmul.f32 %v339, %v348
    %v351 = vmul.f32 %v341, %v349
    %v352 = vpack.c.bf16 %v351, %v350
    %353 = vrot.lane.b32.xlu0 %v149, 48
    %v354 = vpop.permute.xlu0 %353
    %v357 = vsel %vm153, %v352, 0
    %359 = vmatprep.subr.bf16.mxu0 0
    %360 = vmatpush1.bf16.msra.mxu0 %v354
    %361 = vmatprep.subr.bf16.mxu0 0
    %362 = vmatpush1.bf16.msra.mxu0 0
    %363 = vmatprep.subr.bf16.mxu0 0
    %364 = vmatpush1.bf16.msra.mxu0 0
    %365 = vmatprep.subr.bf16.mxu0 0
    %366 = vmatpush1.bf16.msra.mxu0 0
    %367 = vmatprep.subr.bf16.mxu0 0
    %368 = vmatpush1.bf16.msra.mxu0 0
    %369 = vmatprep.subr.bf16.mxu0 0
    %370 = vmatpush1.bf16.msra.mxu0 0
    %371 = vmatprep.subr.bf16.mxu0 0
    %372 = vmatpush1.bf16.msra.mxu0 0
    %373 = vmatprep.subr.bf16.mxu0 0
    %374 = vmatpush1.bf16.msra.mxu0 0
    %375 = vmatprep.subr.bf16.mxu0 0
    %376 = vmatpush1.bf16.msra.mxu0 0
    %377 = vmatprep.subr.bf16.mxu0 0
    %378 = vmatpush1.bf16.msra.mxu0 0
    %379 = vmatprep.subr.bf16.mxu0 0
    %380 = vmatpush1.bf16.msra.mxu0 0
    %381 = vmatprep.subr.bf16.mxu0 0
    %382 = vmatpush1.bf16.msra.mxu0 0
    %383 = vmatprep.subr.bf16.mxu0 0
    %384 = vmatpush1.bf16.msra.mxu0 0
    %385 = vmatprep.subr.bf16.mxu0 0
    %386 = vmatpush1.bf16.msra.mxu0 0
    %387 = vmatprep.subr.bf16.mxu0 0
    %388 = vmatpush1.bf16.msra.mxu0 0
    %389 = vmatprep.subr.bf16.mxu0 0
    %390 = vmatpush1.bf16.msra.mxu0 0
    %391 = vmatprep.mubr.bf16.mxu0 0
    %392 = vmatmul.mubr.bf16.gmra.mrb[0].mxu0 %v357
    %v393 = vpop.f32.mrb[0].mxu0
    %v394 = vadd.f32 0.0, %v393
    %v395 = vpop.f32.mrb[0].mxu0
    %v396 = vpop.f32.mrb[0].mxu0
    %v397 = vadd.f32 0.0, %v396
    %v398 = vpop.f32.mrb[0].mxu0
    %399 = vdwg.mxu0
    %402 = vrot.lane.b32.xlu0 %v394, 16
    %v403 = vpop.permute.xlu0 %402
    %404 = vrot.lane.b32.xlu0 %v397, 16
    %v405 = vpop.permute.xlu0 %404
    %v408 = vsel %vm153, %v269, %v403
    %v409 = vsel %vm153, %v272, %v405
    %v410 = vld [vmem:[%s5] sm:$0xf]
    %v411 = vld [vmem:[%s5 + $0x4] sm:$0xf]
    %v412 = vld [vmem:[%s5 + $0x8] sm:$0xf]
    %v413 = vld [vmem:[%s5 + $0xc] sm:$0xf]
    %v414 = vpack.c.bf16 %v409, %v408
    %v415 = vlaneseq
    %v416 = vshrl.u32 %v415, 7
    %v417 = vsub.s32 1, %v416
    %v418 = vrot.slane %v83, %v417
    %v423 = vunpack.c.l.b16 %v410
    %v424 = vunpack.c.l.b16 %v411
    %v425 = vunpack.c.l.b16 %v412
    %v426 = vunpack.c.l.b16 %v413
    %v427 = vpack.c.b16 %v424, %v423
    %v428 = vpack.c.b16 %v426, %v425
    %v432 = vsel %vm43, %v414, 0
    %434 = vmatprep.subr.bf16.mxu0 0
    %435 = vmatpush1.bf16.msra.mxu0 %v427
    %436 = vmatprep.subr.bf16.mxu0 0
    %437 = vmatpush1.bf16.msra.mxu0 %v428
    %438 = vmatprep.subr.bf16.mxu0 0
    %439 = vmatpush1.bf16.msra.mxu0 0
    %440 = vmatprep.subr.bf16.mxu0 0
    %441 = vmatpush1.bf16.msra.mxu0 0
    %442 = vmatprep.subr.bf16.mxu0 0
    %443 = vmatpush1.bf16.msra.mxu0 0
    %444 = vmatprep.subr.bf16.mxu0 0
    %445 = vmatpush1.bf16.msra.mxu0 0
    %446 = vmatprep.subr.bf16.mxu0 0
    %447 = vmatpush1.bf16.msra.mxu0 0
    %448 = vmatprep.subr.bf16.mxu0 0
    %449 = vmatpush1.bf16.msra.mxu0 0
    %450 = vmatprep.subr.bf16.mxu0 0
    %451 = vmatpush1.bf16.msra.mxu0 0
    %452 = vmatprep.subr.bf16.mxu0 0
    %453 = vmatpush1.bf16.msra.mxu0 0
    %454 = vmatprep.subr.bf16.mxu0 0
    %455 = vmatpush1.bf16.msra.mxu0 0
    %456 = vmatprep.subr.bf16.mxu0 0
    %457 = vmatpush1.bf16.msra.mxu0 0
    %458 = vmatprep.subr.bf16.mxu0 0
    %459 = vmatpush1.bf16.msra.mxu0 0
    %460 = vmatprep.subr.bf16.mxu0 0
    %461 = vmatpush1.bf16.msra.mxu0 0
    %462 = vmatprep.subr.bf16.mxu0 0
    %463 = vmatpush1.bf16.msra.mxu0 0
    %464 = vmatprep.subr.bf16.mxu0 0
    %465 = vmatpush1.bf16.msra.mxu0 0
    %466 = vmatprep.mubr.bf16.mxu0 0
    %467 = vmatmul.mubr.bf16.gmra.mrb[0].mxu0 %v432
    %v468 = vpop.f32.mrb[0].mxu0
    %v469 = vadd.f32 %v418, %v468
    %v470 = vpop.f32.mrb[0].mxu0
    %v471 = vpop.f32.mrb[0].mxu0
    %v472 = vadd.f32 %v418, %v471
    %v473 = vpop.f32.mrb[0].mxu0
    %474 = vdwg.mxu0
    %v475 = vadd.f32 %v469, %v81
    %v476 = vadd.f32 %v472, %v82
    %v477 = vsel %vm43, %v475, 0.0
    %478 = vadd.xlane.f32.xlu0 %v477
    %v479 = vpop.xlane.xlu0 %478
    %v480 = vsel %vm43, %v476, 0.0
    %481 = vadd.xlane.f32.xlu0 %v480
    %v482 = vpop.xlane.xlu0 %481
    %v483 = vmul.f32 %v479, %v50
    %v484 = vmul.f32 %v482, %v50
    %v485 = vsub.f32 %v475, %v483
    %v486 = vsub.f32 %v476, %v484
    %v487 = vmul.f32 %v485, %v485
    %v488 = vmul.f32 %v486, %v486
    %v489 = vsel %vm43, %v487, 0.0
    %490 = vadd.xlane.f32.xlu0 %v489
    %v491 = vpop.xlane.xlu0 %490
    %v492 = vsel %vm43, %v488, 0.0
    %493 = vadd.xlane.f32.xlu0 %v492
    %v494 = vpop.xlane.xlu0 %493
    %v495 = vmul.f32 %v491, %v50
    %v496 = vmul.f32 %v494, %v50
    %v497 = vadd.f32 %v495, 1e-12
    %v498 = vadd.f32 %v496, 1e-12
    %v499 = vrsqrt.pop %v497
    %v500 = vrsqrt.pop %v498
    %v501 = vmul.f32 %v485, %v499
    %v502 = vmul.f32 %v486, %v500
    %v503 = vlaneseq
    %v504 = vshrl.u32 %v503, 7
    %v505 = vsub.s32 2, %v504
    %v506 = vrot.slane %v83, %v505
    %v507 = vmul.f32 %v501, %v506
    %v508 = vmul.f32 %v502, %v506
    %v509 = vlaneseq
    %v510 = vshrl.u32 %v509, 7
    %v511 = vsub.s32 3, %v510
    %v512 = vrot.slane %v83, %v511
    %v513 = vadd.f32 %v507, %v512
    %v514 = vadd.f32 %v508, %v512
    %v515 = vld [vmem:[%s6] sm:$0xf]
    %v516 = vld [vmem:[%s6 + $0x4] sm:$0xf]
    %v517 = vld [vmem:[%s6 + $0x8] sm:$0xf]
    %v518 = vld [vmem:[%s6 + $0xc] sm:$0xf]
    %v519 = vpack.c.bf16 %v514, %v513
    %v520 = vlaneseq
    %v521 = vshrl.u32 %v520, 7
    %v522 = vsub.s32 4, %v521
    %v523 = vrot.slane %v83, %v522
    %v528 = vunpack.c.l.b16 %v515
    %v529 = vunpack.c.l.b16 %v516
    %v530 = vunpack.c.l.b16 %v517
    %v531 = vunpack.c.l.b16 %v518
    %v532 = vpack.c.b16 %v529, %v528
    %v533 = vpack.c.b16 %v531, %v530
    %v537 = vsel %vm43, %v519, 0
    %539 = vmatprep.subr.bf16.mxu0 0
    %540 = vmatpush1.bf16.msra.mxu0 %v532
    %541 = vmatprep.subr.bf16.mxu0 0
    %542 = vmatpush1.bf16.msra.mxu0 %v533
    %543 = vmatprep.subr.bf16.mxu0 0
    %544 = vmatpush1.bf16.msra.mxu0 0
    %545 = vmatprep.subr.bf16.mxu0 0
    %546 = vmatpush1.bf16.msra.mxu0 0
    %547 = vmatprep.subr.bf16.mxu0 0
    %548 = vmatpush1.bf16.msra.mxu0 0
    %549 = vmatprep.subr.bf16.mxu0 0
    %550 = vmatpush1.bf16.msra.mxu0 0
    %551 = vmatprep.subr.bf16.mxu0 0
    %552 = vmatpush1.bf16.msra.mxu0 0
    %553 = vmatprep.subr.bf16.mxu0 0
    %554 = vmatpush1.bf16.msra.mxu0 0
    %555 = vmatprep.subr.bf16.mxu0 0
    %556 = vmatpush1.bf16.msra.mxu0 0
    %557 = vmatprep.subr.bf16.mxu0 0
    %558 = vmatpush1.bf16.msra.mxu0 0
    %559 = vmatprep.subr.bf16.mxu0 0
    %560 = vmatpush1.bf16.msra.mxu0 0
    %561 = vmatprep.subr.bf16.mxu0 0
    %562 = vmatpush1.bf16.msra.mxu0 0
    %563 = vmatprep.subr.bf16.mxu0 0
    %564 = vmatpush1.bf16.msra.mxu0 0
    %565 = vmatprep.subr.bf16.mxu0 0
    %566 = vmatpush1.bf16.msra.mxu0 0
    %567 = vmatprep.subr.bf16.mxu0 0
    %568 = vmatpush1.bf16.msra.mxu0 0
    %569 = vmatprep.subr.bf16.mxu0 0
    %570 = vmatpush1.bf16.msra.mxu0 0
    %571 = vmatprep.mubr.bf16.mxu0 0
    %572 = vmatmul.mubr.bf16.gmra.mrb[0].mxu0 %v537
    %v573 = vpop.f32.mrb[0].mxu0
    %v574 = vadd.f32 %v523, %v573
    %v575 = vpop.f32.mrb[0].mxu0
    %v576 = vpop.f32.mrb[0].mxu0
    %v577 = vadd.f32 %v523, %v576
    %v578 = vpop.f32.mrb[0].mxu0
    %579 = vdwg.mxu0
    %v580 = vmul.f32 %v574, 0.5
    %v581 = vmul.f32 %v577, 0.5
    %v582 = vmul.f32 %v574, 0.044715
    %v583 = vmul.f32 %v577, 0.044715
    %v584 = vmul.f32 %v582, %v574
    %v585 = vmul.f32 %v583, %v577
    %v586 = vmul.f32 %v584, %v574
    %v587 = vmul.f32 %v585, %v577
    %v588 = vadd.f32 %v574, %v586
    %v589 = vadd.f32 %v577, %v587
    %v590 = vmul.f32 %v588, 0.7978846
    %v591 = vmul.f32 %v589, 0.7978846
    %v592 = vtanh.pop %v590
    %v593 = vtanh.pop %v591
    %v594 = vadd.f32 %v592, 1.0
    %v595 = vadd.f32 %v593, 1.0
    %v596 = vmul.f32 %v580, %v594
    %v597 = vmul.f32 %v581, %v595
    %v598 = vld [vmem:[%s7] sm:$0xf]
    %v599 = vld [vmem:[%s7 + $0x4] sm:$0xf]
    %v600 = vld [vmem:[%s7 + $0x8] sm:$0xf]
    %v601 = vld [vmem:[%s7 + $0xc] sm:$0xf]
    %v602 = vld [vmem:[%s7 + $0x10] sm:$0xf]
    %v603 = vld [vmem:[%s7 + $0x14] sm:$0xf]
    %v604 = vld [vmem:[%s7 + $0x18] sm:$0xf]
    %v605 = vld [vmem:[%s7 + $0x1c] sm:$0xf]
    %v606 = vpack.c.bf16 %v597, %v596
    %v607 = vlaneseq
    %v608 = vshrl.u32 %v607, 7
    %v609 = vsub.s32 5, %v608
    %v610 = vrot.slane %v83, %v609
    %v619 = vunpack.c.l.b16 %v598
    %v620 = vunpack.c.l.b16 %v599
    %v621 = vunpack.c.l.b16 %v600
    %v622 = vunpack.c.l.b16 %v601
    %v623 = vunpack.c.l.b16 %v602
    %v624 = vunpack.c.l.b16 %v603
    %v625 = vunpack.c.l.b16 %v604
    %v626 = vunpack.c.l.b16 %v605
    %v627 = vpack.c.b16 %v620, %v619
    %v628 = vpack.c.b16 %v622, %v621
    %v629 = vpack.c.b16 %v624, %v623
    %v630 = vpack.c.b16 %v626, %v625
    %vm635 = vcmask 523264
    %v637 = vsel %vm635, %v606, 0
    %639 = vmatprep.subr.bf16.mxu0 0
    %640 = vmatpush1.bf16.msra.mxu0 %v627
    %641 = vmatprep.subr.bf16.mxu0 0
    %642 = vmatpush1.bf16.msra.mxu0 %v628
    %643 = vmatprep.subr.bf16.mxu0 0
    %644 = vmatpush1.bf16.msra.mxu0 %v629
    %645 = vmatprep.subr.bf16.mxu0 0
    %646 = vmatpush1.bf16.msra.mxu0 %v630
    %647 = vmatprep.subr.bf16.mxu0 0
    %648 = vmatpush1.bf16.msra.mxu0 0
    %649 = vmatprep.subr.bf16.mxu0 0
    %650 = vmatpush1.bf16.msra.mxu0 0
    %651 = vmatprep.subr.bf16.mxu0 0
    %652 = vmatpush1.bf16.msra.mxu0 0
    %653 = vmatprep.subr.bf16.mxu0 0
    %654 = vmatpush1.bf16.msra.mxu0 0
    %655 = vmatprep.subr.bf16.mxu0 0
    %656 = vmatpush1.bf16.msra.mxu0 0
    %657 = vmatprep.subr.bf16.mxu0 0
    %658 = vmatpush1.bf16.msra.mxu0 0
    %659 = vmatprep.subr.bf16.mxu0 0
    %660 = vmatpush1.bf16.msra.mxu0 0
    %661 = vmatprep.subr.bf16.mxu0 0
    %662 = vmatpush1.bf16.msra.mxu0 0
    %663 = vmatprep.subr.bf16.mxu0 0
    %664 = vmatpush1.bf16.msra.mxu0 0
    %665 = vmatprep.subr.bf16.mxu0 0
    %666 = vmatpush1.bf16.msra.mxu0 0
    %667 = vmatprep.subr.bf16.mxu0 0
    %668 = vmatpush1.bf16.msra.mxu0 0
    %669 = vmatprep.subr.bf16.mxu0 0
    %670 = vmatpush1.bf16.msra.mxu0 0
    %671 = vmatprep.mubr.bf16.mxu0 0
    %672 = vmatmul.mubr.bf16.gmra.mrb[0].mxu0 %v637
    %v673 = vpop.f32.mrb[0].mxu0
    %v674 = vadd.f32 %v610, %v673
    %v675 = vpop.f32.mrb[0].mxu0
    %v676 = vpop.f32.mrb[0].mxu0
    %v677 = vadd.f32 %v610, %v676
    %v678 = vpop.f32.mrb[0].mxu0
    %679 = vdwg.mxu0
    %v680 = vadd.f32 %v674, %v513
    %v681 = vadd.f32 %v677, %v514
    %v682 = vsel %vm43, %v680, 0.0
    %683 = vadd.xlane.f32.xlu0 %v682
    %v684 = vpop.xlane.xlu0 %683
    %v685 = vsel %vm43, %v681, 0.0
    %686 = vadd.xlane.f32.xlu0 %v685
    %v687 = vpop.xlane.xlu0 %686
    %v688 = vmul.f32 %v684, %v50
    %v689 = vmul.f32 %v687, %v50
    %v690 = vsub.f32 %v680, %v688
    %v691 = vsub.f32 %v681, %v689
    %v692 = vmul.f32 %v690, %v690
    %v693 = vmul.f32 %v691, %v691
    %v694 = vsel %vm43, %v692, 0.0
    %695 = vadd.xlane.f32.xlu0 %v694
    %v696 = vpop.xlane.xlu0 %695
    %v697 = vsel %vm43, %v693, 0.0
    %698 = vadd.xlane.f32.xlu0 %v697
    %v699 = vpop.xlane.xlu0 %698
    %v700 = vmul.f32 %v696, %v50
    %v701 = vmul.f32 %v699, %v50
    %v702 = vadd.f32 %v700, 1e-12
    %v703 = vadd.f32 %v701, 1e-12
    %v704 = vrsqrt.pop %v702
    %v705 = vrsqrt.pop %v703
    %v706 = vmul.f32 %v690, %v704
    %v707 = vmul.f32 %v691, %v705
    %v708 = vlaneseq
    %v709 = vshrl.u32 %v708, 7
    %v710 = vsub.s32 6, %v709
    %v711 = vrot.slane %v83, %v710
    %v712 = vmul.f32 %v706, %v711
    %v713 = vmul.f32 %v707, %v711
    %v714 = vlaneseq
    %v715 = vshrl.u32 %v714, 7
    %v716 = vsub.s32 7, %v715
    %v717 = vrot.slane %v83, %v716
    %v718 = vadd.f32 %v712, %v717
    %v719 = vadd.f32 %v713, %v717
    %s720 = scalar_lea.vmem %s2, 8
    %v721 = vld [vmem:[%s720] sm:$0xff]
    %s722 = scalar_lea.vmem %s4, 16
    %v723 = vld [vmem:[%s722] sm:$0xf]
    %v724 = vld [vmem:[%s722 + $0x4] sm:$0xf]
    %v725 = vld [vmem:[%s722 + $0x8] sm:$0xf]
    %v726 = vld [vmem:[%s722 + $0xc] sm:$0xf]
    %v727 = vpack.c.bf16 %v719, %v718
    %v728 = vlaneseq
    %v729 = vshrl.u32 %v728, 7
    %v730 = vsub.s32 0, %v729
    %v731 = vrot.slane %v721, %v730
    %v736 = vunpack.c.l.b16 %v723
    %v737 = vunpack.c.l.b16 %v724
    %v738 = vunpack.c.l.b16 %v725
    %v739 = vunpack.c.l.b16 %v726
    %v740 = vpack.c.b16 %v737, %v736
    %v741 = vpack.c.b16 %v739, %v738
    %v745 = vsel %vm43, %v727, 0
    %747 = vmatprep.subr.bf16.mxu0 0
    %748 = vmatpush1.bf16.msra.mxu0 %v740
    %749 = vmatprep.subr.bf16.mxu0 0
    %750 = vmatpush1.bf16.msra.mxu0 %v741
    %751 = vmatprep.subr.bf16.mxu0 0
    %752 = vmatpush1.bf16.msra.mxu0 0
    %753 = vmatprep.subr.bf16.mxu0 0
    %754 = vmatpush1.bf16.msra.mxu0 0
    %755 = vmatprep.subr.bf16.mxu0 0
    %756 = vmatpush1.bf16.msra.mxu0 0
    %757 = vmatprep.subr.bf16.mxu0 0
    %758 = vmatpush1.bf16.msra.mxu0 0
    %759 = vmatprep.subr.bf16.mxu0 0
    %760 = vmatpush1.bf16.msra.mxu0 0
    %761 = vmatprep.subr.bf16.mxu0 0
    %762 = vmatpush1.bf16.msra.mxu0 0
    %763 = vmatprep.subr.bf16.mxu0 0
    %764 = vmatpush1.bf16.msra.mxu0 0
    %765 = vmatprep.subr.bf16.mxu0 0
    %766 = vmatpush1.bf16.msra.mxu0 0
    %767 = vmatprep.subr.bf16.mxu0 0
    %768 = vmatpush1.bf16.msra.mxu0 0
    %769 = vmatprep.subr.bf16.mxu0 0
    %770 = vmatpush1.bf16.msra.mxu0 0
    %771 = vmatprep.subr.bf16.mxu0 0
    %772 = vmatpush1.bf16.msra.mxu0 0
    %773 = vmatprep.subr.bf16.mxu0 0
    %774 = vmatpush1.bf16.msra.mxu0 0
    %775 = vmatprep.subr.bf16.mxu0 0
    %776 = vmatpush1.bf16.msra.mxu0 0
    %777 = vmatprep.subr.bf16.mxu0 0
    %778 = vmatpush1.bf16.msra.mxu0 0
    %779 = vmatprep.mubr.bf16.mxu0 0
    %780 = vmatmul.mubr.bf16.gmra.mrb[0].mxu0 %v745
    %v781 = vpop.f32.mrb[0].mxu0
    %v782 = vadd.f32 %v731, %v781
    %v783 = vpop.f32.mrb[0].mxu0
    %v784 = vpop.f32.mrb[0].mxu0
    %v785 = vadd.f32 %v731, %v784
    %v786 = vpop.f32.mrb[0].mxu0
    %787 = vdwg.mxu0
    %v788 = vpack.c.bf16 %v785, %v782
    %790 = vrot.lane.b32.xlu0 %v788, 96
    %v791 = vpop.permute.xlu0 %790
    %v793 = vsel %vm153, %v788, 0
    %v796 = vsel %vm153, %v791, 0
    %798 = vmatprep.subr.bf16.mxu0 0
    %799 = vmatpush1.bf16.xpose.msra.mxu0 %v796
    %800 = vmatprep.subr.bf16.mxu0 0
    %801 = vmatpush1.bf16.xpose.msra.mxu0 0
    %802 = vmatprep.subr.bf16.mxu0 0
    %803 = vmatpush1.bf16.xpose.msra.mxu0 0
    %804 = vmatprep.subr.bf16.mxu0 0
    %805 = vmatpush1.bf16.xpose.msra.mxu0 0
    %806 = vmatprep.subr.bf16.mxu0 0
    %807 = vmatpush1.bf16.xpose.msra.mxu0 0
    %808 = vmatprep.subr.bf16.mxu0 0
    %809 = vmatpush1.bf16.xpose.msra.mxu0 0
    %810 = vmatprep.subr.bf16.mxu0 0
    %811 = vmatpush1.bf16.xpose.msra.mxu0 0
    %812 = vmatprep.subr.bf16.mxu0 0
    %813 = vmatpush1.bf16.xpose.msra.mxu0 0
    %814 = vmatprep.subr.bf16.mxu0 0
    %815 = vmatpush1.bf16.xpose.msra.mxu0 0
    %816 = vmatprep.subr.bf16.mxu0 0
    %817 = vmatpush1.bf16.xpose.msra.mxu0 0
    %818 = vmatprep.subr.bf16.mxu0 0
    %819 = vmatpush1.bf16.xpose.msra.mxu0 0
    %820 = vmatprep.subr.bf16.mxu0 0
    %821 = vmatpush1.bf16.xpose.msra.mxu0 0
    %822 = vmatprep.subr.bf16.mxu0 0
    %823 = vmatpush1.bf16.xpose.msra.mxu0 0
    %824 = vmatprep.subr.bf16.mxu0 0
    %825 = vmatpush1.bf16.xpose.msra.mxu0 0
    %826 = vmatprep.subr.bf16.mxu0 0
    %827 = vmatpush1.bf16.xpose.msra.mxu0 0
    %828 = vmatprep.subr.bf16.mxu0 0
    %829 = vmatpush1.bf16.xpose.msra.mxu0 0
    %830 = vmatprep.mubr.bf16.mxu0 0
    %831 = vmatmul.mubr.bf16.gmra.mrb[0].mxu0 %v793
    %v832 = vpop.f32.mrb[0].mxu0
    %v833 = vadd.f32 0.0, %v832
    %v834 = vpop.f32.mrb[0].mxu0
    %v835 = vpop.f32.mrb[0].mxu0
    %v836 = vadd.f32 0.0, %v835
    %v837 = vpop.f32.mrb[0].mxu0
    %838 = vdwg.mxu0
    %v839 = vmul.f32 %v833, 0.25
    %v840 = vmul.f32 %v836, 0.25
    %v841 = vadd.f32 %v839, %v37
    %v842 = vadd.f32 %v840, %v38
    %v843 = vsel %vm153, %v841, -inf
    %844 = vmax.xlane.f32.xlu0 %v843
    %v845 = vpop.xlane.xlu0 %844
    %v846 = vsel %vm153, %v842, -inf
    %847 = vmax.xlane.f32.xlu0 %v846
    %v848 = vpop.xlane.xlu0 %847
    %v849 = vsub.f32 %v841, %v845
    %v850 = vsub.f32 %v842, %v848
    %v851 = vmul.f32 %v849, 1.442695
    %v852 = vpow.pop %v851
    %v853 = vmul.f32 %v850, 1.442695
    %v854 = vpow.pop %v853
    %v855 = vsel %vm153, %v852, 0.0
    %856 = vadd.xlane.f32.xlu0 %v855
    %v857 = vpop.xlane.xlu0 %856
    %v858 = vsel %vm153, %v854, 0.0
    %859 = vadd.xlane.f32.xlu0 %v858
    %v860 = vpop.xlane.xlu0 %859
    %v861 = vrcp.pop %v857
    %v862 = vrcp.pop %v860
    %v863 = vmul.f32 %v852, %v861
    %v864 = vmul.f32 %v854, %v862
    %v865 = vpack.c.bf16 %v864, %v863
    %866 = vrot.lane.b32.xlu0 %v788, 64
    %v867 = vpop.permute.xlu0 %866
    %v870 = vsel %vm153, %v865, 0
    %872 = vmatprep.subr.bf16.mxu0 0
    %873 = vmatpush1.bf16.msra.mxu0 %v867
    %874 = vmatprep.subr.bf16.mxu0 0
    %875 = vmatpush1.bf16.msra.mxu0 0
    %876 = vmatprep.subr.bf16.mxu0 0
    %877 = vmatpush1.bf16.msra.mxu0 0
    %878 = vmatprep.subr.bf16.mxu0 0
    %879 = vmatpush1.bf16.msra.mxu0 0
    %880 = vmatprep.subr.bf16.mxu0 0
    %881 = vmatpush1.bf16.msra.mxu0 0
    %882 = vmatprep.subr.bf16.mxu0 0
    %883 = vmatpush1.bf16.msra.mxu0 0
    %884 = vmatprep.subr.bf16.mxu0 0
    %885 = vmatpush1.bf16.msra.mxu0 0
    %886 = vmatprep.subr.bf16.mxu0 0
    %887 = vmatpush1.bf16.msra.mxu0 0
    %888 = vmatprep.subr.bf16.mxu0 0
    %889 = vmatpush1.bf16.msra.mxu0 0
    %890 = vmatprep.subr.bf16.mxu0 0
    %891 = vmatpush1.bf16.msra.mxu0 0
    %892 = vmatprep.subr.bf16.mxu0 0
    %893 = vmatpush1.bf16.msra.mxu0 0
    %894 = vmatprep.subr.bf16.mxu0 0
    %895 = vmatpush1.bf16.msra.mxu0 0
    %896 = vmatprep.subr.bf16.mxu0 0
    %897 = vmatpush1.bf16.msra.mxu0 0
    %898 = vmatprep.subr.bf16.mxu0 0
    %899 = vmatpush1.bf16.msra.mxu0 0
    %900 = vmatprep.subr.bf16.mxu0 0
    %901 = vmatpush1.bf16.msra.mxu0 0
    %902 = vmatprep.subr.bf16.mxu0 0
    %903 = vmatpush1.bf16.msra.mxu0 0
    %904 = vmatprep.mubr.bf16.mxu0 0
    %905 = vmatmul.mubr.bf16.gmra.mrb[0].mxu0 %v870
    %v906 = vpop.f32.mrb[0].mxu0
    %v907 = vadd.f32 0.0, %v906
    %v908 = vpop.f32.mrb[0].mxu0
    %v909 = vpop.f32.mrb[0].mxu0
    %v910 = vadd.f32 0.0, %v909
    %v911 = vpop.f32.mrb[0].mxu0
    %912 = vdwg.mxu0
    %913 = vrot.lane.b32.xlu0 %v788, 112
    %v914 = vpop.permute.xlu0 %913
    %915 = vrot.lane.b32.xlu0 %v788, 80
    %v916 = vpop.permute.xlu0 %915
    %v918 = vsel %vm153, %v914, 0
    %v921 = vsel %vm153, %v916, 0
    %923 = vmatprep.subr.bf16.mxu0 0
    %924 = vmatpush1.bf16.xpose.msra.mxu0 %v921
    %925 = vmatprep.subr.bf16.mxu0 0
    %926 = vmatpush1.bf16.xpose.msra.mxu0 0
    %927 = vmatprep.subr.bf16.mxu0 0
    %928 = vmatpush1.bf16.xpose.msra.mxu0 0
    %929 = vmatprep.subr.bf16.mxu0 0
    %930 = vmatpush1.bf16.xpose.msra.mxu0 0
    %931 = vmatprep.subr.bf16.mxu0 0
    %932 = vmatpush1.bf16.xpose.msra.mxu0 0
    %933 = vmatprep.subr.bf16.mxu0 0
    %934 = vmatpush1.bf16.xpose.msra.mxu0 0
    %935 = vmatprep.subr.bf16.mxu0 0
    %936 = vmatpush1.bf16.xpose.msra.mxu0 0
    %937 = vmatprep.subr.bf16.mxu0 0
    %938 = vmatpush1.bf16.xpose.msra.mxu0 0
    %939 = vmatprep.subr.bf16.mxu0 0
    %940 = vmatpush1.bf16.xpose.msra.mxu0 0
    %941 = vmatprep.subr.bf16.mxu0 0
    %942 = vmatpush1.bf16.xpose.msra.mxu0 0
    %943 = vmatprep.subr.bf16.mxu0 0
    %944 = vmatpush1.bf16.xpose.msra.mxu0 0
    %945 = vmatprep.subr.bf16.mxu0 0
    %946 = vmatpush1.bf16.xpose.msra.mxu0 0
    %947 = vmatprep.subr.bf16.mxu0 0
    %948 = vmatpush1.bf16.xpose.msra.mxu0 0
    %949 = vmatprep.subr.bf16.mxu0 0
    %950 = vmatpush1.bf16.xpose.msra.mxu0 0
    %951 = vmatprep.subr.bf16.mxu0 0
    %952 = vmatpush1.bf16.xpose.msra.mxu0 0
    %953 = vmatprep.subr.bf16.mxu0 0
    %954 = vmatpush1.bf16.xpose.msra.mxu0 0
    %955 = vmatprep.mubr.bf16.mxu0 0
    %956 = vmatmul.mubr.bf16.gmra.mrb[0].mxu0 %v918
    %v957 = vpop.f32.mrb[0].mxu0
    %v958 = vadd.f32 0.0, %v957
    %v959 = vpop.f32.mrb[0].mxu0
    %v960 = vpop.f32.mrb[0].mxu0
    %v961 = vadd.f32 0.0, %v960
    %v962 = vpop.f32.mrb[0].mxu0
    %963 = vdwg.mxu0
    %v964 = vmul.f32 %v958, 0.25
    %v965 = vmul.f32 %v961, 0.25
    %v966 = vadd.f32 %v964, %v37
    %v967 = vadd.f32 %v965, %v38
    %v968 = vsel %vm153, %v966, -inf
    %969 = vmax.xlane.f32.xlu0 %v968
    %v970 = vpop.xlane.xlu0 %969
    %v971 = vsel %vm153, %v967, -inf
    %972 = vmax.xlane.f32.xlu0 %v971
    %v973 = vpop.xlane.xlu0 %972
    %v974 = vsub.f32 %v966, %v970
    %v975 = vsub.f32 %v967, %v973
    %v976 = vmul.f32 %v974, 1.442695
    %v977 = vpow.pop %v976
    %v978 = vmul.f32 %v975, 1.442695
    %v979 = vpow.pop %v978
    %v980 = vsel %vm153, %v977, 0.0
    %981 = vadd.xlane.f32.xlu0 %v980
    %v982 = vpop.xlane.xlu0 %981
    %v983 = vsel %vm153, %v979, 0.0
    %984 = vadd.xlane.f32.xlu0 %v983
    %v985 = vpop.xlane.xlu0 %984
    %v986 = vrcp.pop %v982
    %v987 = vrcp.pop %v985
    %v988 = vmul.f32 %v977, %v986
    %v989 = vmul.f32 %v979, %v987
    %v990 = vpack.c.bf16 %v989, %v988
    %991 = vrot.lane.b32.xlu0 %v788, 48
    %v992 = vpop.permute.xlu0 %991
    %v995 = vsel %vm153, %v990, 0
    %997 = vmatprep.subr.bf16.mxu0 0
    %998 = vmatpush1.bf16.msra.mxu0 %v992
    %999 = vmatprep.subr.bf16.mxu0 0
    %1000 = vmatpush1.bf16.msra.mxu0 0
    %1001 = vmatprep.subr.bf16.mxu0 0
    %1002 = vmatpush1.bf16.msra.mxu0 0
    %1003 = vmatprep.subr.bf16.mxu0 0
    %1004 = vmatpush1.bf16.msra.mxu0 0
    %1005 = vmatprep.subr.bf16.mxu0 0
    %1006 = vmatpush1.bf16.msra.mxu0 0
    %1007 = vmatprep.subr.bf16.mxu0 0
    %1008 = vmatpush1.bf16.msra.mxu0 0
    %1009 = vmatprep.subr.bf16.mxu0 0
    %1010 = vmatpush1.bf16.msra.mxu0 0
    %1011 = vmatprep.subr.bf16.mxu0 0
    %1012 = vmatpush1.bf16.msra.mxu0 0
    %1013 = vmatprep.subr.bf16.mxu0 0
    %1014 = vmatpush1.bf16.msra.mxu0 0
    %1015 = vmatprep.subr.bf16.mxu0 0
    %1016 = vmatpush1.bf16.msra.mxu0 0
    %1017 = vmatprep.subr.bf16.mxu0 0
    %1018 = vmatpush1.bf16.msra.mxu0 0
    %1019 = vmatprep.subr.bf16.mxu0 0
    %1020 = vmatpush1.bf16.msra.mxu0 0
    %1021 = vmatprep.subr.bf16.mxu0 0
    %1022 = vmatpush1.bf16.msra.mxu0 0
    %1023 = vmatprep.subr.bf16.mxu0 0
    %1024 = vmatpush1.bf16.msra.mxu0 0
    %1025 = vmatprep.subr.bf16.mxu0 0
    %1026 = vmatpush1.bf16.msra.mxu0 0
    %1027 = vmatprep.subr.bf16.mxu0 0
    %1028 = vmatpush1.bf16.msra.mxu0 0
    %1029 = vmatprep.mubr.bf16.mxu0 0
    %1030 = vmatmul.mubr.bf16.gmra.mrb[0].mxu0 %v995
    %v1031 = vpop.f32.mrb[0].mxu0
    %v1032 = vadd.f32 0.0, %v1031
    %v1033 = vpop.f32.mrb[0].mxu0
    %v1034 = vpop.f32.mrb[0].mxu0
    %v1035 = vadd.f32 0.0, %v1034
    %v1036 = vpop.f32.mrb[0].mxu0
    %1037 = vdwg.mxu0
    %1040 = vrot.lane.b32.xlu0 %v1032, 16
    %v1041 = vpop.permute.xlu0 %1040
    %1042 = vrot.lane.b32.xlu0 %v1035, 16
    %v1043 = vpop.permute.xlu0 %1042
    %v1046 = vsel %vm153, %v907, %v1041
    %v1047 = vsel %vm153, %v910, %v1043
    %s1048 = scalar_lea.vmem %s5, 16
    %v1049 = vld [vmem:[%s1048] sm:$0xf]
    %v1050 = vld [vmem:[%s1048 + $0x4] sm:$0xf]
    %v1051 = vld [vmem:[%s1048 + $0x8] sm:$0xf]
    %v1052 = vld [vmem:[%s1048 + $0xc] sm:$0xf]
    %v1053 = vpack.c.bf16 %v1047, %v1046
    %v1054 = vlaneseq
    %v1055 = vshrl.u32 %v1054, 7
    %v1056 = vsub.s32 1, %v1055
    %v1057 = vrot.slane %v721, %v1056
    %v1062 = vunpack.c.l.b16 %v1049
    %v1063 = vunpack.c.l.b16 %v1050
    %v1064 = vunpack.c.l.b16 %v1051
    %v1065 = vunpack.c.l.b16 %v1052
    %v1066 = vpack.c.b16 %v1063, %v1062
    %v1067 = vpack.c.b16 %v1065, %v1064
    %v1071 = vsel %vm43, %v1053, 0
    %1073 = vmatprep.subr.bf16.mxu0 0
    %1074 = vmatpush1.bf16.msra.mxu0 %v1066
    %1075 = vmatprep.subr.bf16.mxu0 0
    %1076 = vmatpush1.bf16.msra.mxu0 %v1067
    %1077 = vmatprep.subr.bf16.mxu0 0
    %1078 = vmatpush1.bf16.msra.mxu0 0
    %1079 = vmatprep.subr.bf16.mxu0 0
    %1080 = vmatpush1.bf16.msra.mxu0 0
    %1081 = vmatprep.subr.bf16.mxu0 0
    %1082 = vmatpush1.bf16.msra.mxu0 0
    %1083 = vmatprep.subr.bf16.mxu0 0
    %1084 = vmatpush1.bf16.msra.mxu0 0
    %1085 = vmatprep.subr.bf16.mxu0 0
    %1086 = vmatpush1.bf16.msra.mxu0 0
    %1087 = vmatprep.subr.bf16.mxu0 0
    %1088 = vmatpush1.bf16.msra.mxu0 0
    %1089 = vmatprep.subr.bf16.mxu0 0
    %1090 = vmatpush1.bf16.msra.mxu0 0
    %1091 = vmatprep.subr.bf16.mxu0 0
    %1092 = vmatpush1.bf16.msra.mxu0 0
    %1093 = vmatprep.subr.bf16.mxu0 0
    %1094 = vmatpush1.bf16.msra.mxu0 0
    %1095 = vmatprep.subr.bf16.mxu0 0
    %1096 = vmatpush1.bf16.msra.mxu0 0
    %1097 = vmatprep.subr.bf16.mxu0 0
    %1098 = vmatpush1.bf16.msra.mxu0 0
    %1099 = vmatprep.subr.bf16.mxu0 0
    %1100 = vmatpush1.bf16.msra.mxu0 0
    %1101 = vmatprep.subr.bf16.mxu0 0
    %1102 = vmatpush1.bf16.msra.mxu0 0
    %1103 = vmatprep.subr.bf16.mxu0 0
    %1104 = vmatpush1.bf16.msra.mxu0 0
    %1105 = vmatprep.mubr.bf16.mxu0 0
    %1106 = vmatmul.mubr.bf16.gmra.mrb[0].mxu0 %v1071
    %v1107 = vpop.f32.mrb[0].mxu0
    %v1108 = vadd.f32 %v1057, %v1107
    %v1109 = vpop.f32.mrb[0].mxu0
    %v1110 = vpop.f32.mrb[0].mxu0
    %v1111 = vadd.f32 %v1057, %v1110
    %v1112 = vpop.f32.mrb[0].mxu0
    %1113 = vdwg.mxu0
    %v1114 = vadd.f32 %v1108, %v718
    %v1115 = vadd.f32 %v1111, %v719
    %v1116 = vsel %vm43, %v1114, 0.0
    %1117 = vadd.xlane.f32.xlu0 %v1116
    %v1118 = vpop.xlane.xlu0 %1117
    %v1119 = vsel %vm43, %v1115, 0.0
    %1120 = vadd.xlane.f32.xlu0 %v1119
    %v1121 = vpop.xlane.xlu0 %1120
    %v1122 = vmul.f32 %v1118, %v50
    %v1123 = vmul.f32 %v1121, %v50
    %v1124 = vsub.f32 %v1114, %v1122
    %v1125 = vsub.f32 %v1115, %v1123
    %v1126 = vmul.f32 %v1124, %v1124
    %v1127 = vmul.f32 %v1125, %v1125
    %v1128 = vsel %vm43, %v1126, 0.0
    %1129 = vadd.xlane.f32.xlu0 %v1128
    %v1130 = vpop.xlane.xlu0 %1129
    %v1131 = vsel %vm43, %v1127, 0.0
    %1132 = vadd.xlane.f32.xlu0 %v1131
    %v1133 = vpop.xlane.xlu0 %1132
    %v1134 = vmul.f32 %v1130, %v50
    %v1135 = vmul.f32 %v1133, %v50
    %v1136 = vadd.f32 %v1134, 1e-12
    %v1137 = vadd.f32 %v1135, 1e-12
    %v1138 = vrsqrt.pop %v1136
    %v1139 = vrsqrt.pop %v1137
    %v1140 = vmul.f32 %v1124, %v1138
    %v1141 = vmul.f32 %v1125, %v1139
    %v1142 = vlaneseq
    %v1143 = vshrl.u32 %v1142, 7
    %v1144 = vsub.s32 2, %v1143
    %v1145 = vrot.slane %v721, %v1144
    %v1146 = vmul.f32 %v1140, %v1145
    %v1147 = vmul.f32 %v1141, %v1145
    %v1148 = vlaneseq
    %v1149 = vshrl.u32 %v1148, 7
    %v1150 = vsub.s32 3, %v1149
    %v1151 = vrot.slane %v721, %v1150
    %v1152 = vadd.f32 %v1146, %v1151
    %v1153 = vadd.f32 %v1147, %v1151
    %s1154 = scalar_lea.vmem %s6, 16
    %v1155 = vld [vmem:[%s1154] sm:$0xf]
    %v1156 = vld [vmem:[%s1154 + $0x4] sm:$0xf]
    %v1157 = vld [vmem:[%s1154 + $0x8] sm:$0xf]
    %v1158 = vld [vmem:[%s1154 + $0xc] sm:$0xf]
    %v1159 = vpack.c.bf16 %v1153, %v1152
    %v1160 = vlaneseq
    %v1161 = vshrl.u32 %v1160, 7
    %v1162 = vsub.s32 4, %v1161
    %v1163 = vrot.slane %v721, %v1162
    %v1168 = vunpack.c.l.b16 %v1155
    %v1169 = vunpack.c.l.b16 %v1156
    %v1170 = vunpack.c.l.b16 %v1157
    %v1171 = vunpack.c.l.b16 %v1158
    %v1172 = vpack.c.b16 %v1169, %v1168
    %v1173 = vpack.c.b16 %v1171, %v1170
    %v1177 = vsel %vm43, %v1159, 0
    %1179 = vmatprep.subr.bf16.mxu0 0
    %1180 = vmatpush1.bf16.msra.mxu0 %v1172
    %1181 = vmatprep.subr.bf16.mxu0 0
    %1182 = vmatpush1.bf16.msra.mxu0 %v1173
    %1183 = vmatprep.subr.bf16.mxu0 0
    %1184 = vmatpush1.bf16.msra.mxu0 0
    %1185 = vmatprep.subr.bf16.mxu0 0
    %1186 = vmatpush1.bf16.msra.mxu0 0
    %1187 = vmatprep.subr.bf16.mxu0 0
    %1188 = vmatpush1.bf16.msra.mxu0 0
    %1189 = vmatprep.subr.bf16.mxu0 0
    %1190 = vmatpush1.bf16.msra.mxu0 0
    %1191 = vmatprep.subr.bf16.mxu0 0
    %1192 = vmatpush1.bf16.msra.mxu0 0
    %1193 = vmatprep.subr.bf16.mxu0 0
    %1194 = vmatpush1.bf16.msra.mxu0 0
    %1195 = vmatprep.subr.bf16.mxu0 0
    %1196 = vmatpush1.bf16.msra.mxu0 0
    %1197 = vmatprep.subr.bf16.mxu0 0
    %1198 = vmatpush1.bf16.msra.mxu0 0
    %1199 = vmatprep.subr.bf16.mxu0 0
    %1200 = vmatpush1.bf16.msra.mxu0 0
    %1201 = vmatprep.subr.bf16.mxu0 0
    %1202 = vmatpush1.bf16.msra.mxu0 0
    %1203 = vmatprep.subr.bf16.mxu0 0
    %1204 = vmatpush1.bf16.msra.mxu0 0
    %1205 = vmatprep.subr.bf16.mxu0 0
    %1206 = vmatpush1.bf16.msra.mxu0 0
    %1207 = vmatprep.subr.bf16.mxu0 0
    %1208 = vmatpush1.bf16.msra.mxu0 0
    %1209 = vmatprep.subr.bf16.mxu0 0
    %1210 = vmatpush1.bf16.msra.mxu0 0
    %1211 = vmatprep.mubr.bf16.mxu0 0
    %1212 = vmatmul.mubr.bf16.gmra.mrb[0].mxu0 %v1177
    %v1213 = vpop.f32.mrb[0].mxu0
    %v1214 = vadd.f32 %v1163, %v1213
    %v1215 = vpop.f32.mrb[0].mxu0
    %v1216 = vpop.f32.mrb[0].mxu0
    %v1217 = vadd.f32 %v1163, %v1216
    %v1218 = vpop.f32.mrb[0].mxu0
    %1219 = vdwg.mxu0
    %v1220 = vmul.f32 %v1214, 0.5
    %v1221 = vmul.f32 %v1217, 0.5
    %v1222 = vmul.f32 %v1214, 0.044715
    %v1223 = vmul.f32 %v1217, 0.044715
    %v1224 = vmul.f32 %v1222, %v1214
    %v1225 = vmul.f32 %v1223, %v1217
    %v1226 = vmul.f32 %v1224, %v1214
    %v1227 = vmul.f32 %v1225, %v1217
    %v1228 = vadd.f32 %v1214, %v1226
    %v1229 = vadd.f32 %v1217, %v1227
    %v1230 = vmul.f32 %v1228, 0.7978846
    %v1231 = vmul.f32 %v1229, 0.7978846
    %v1232 = vtanh.pop %v1230
    %v1233 = vtanh.pop %v1231
    %v1234 = vadd.f32 %v1232, 1.0
    %v1235 = vadd.f32 %v1233, 1.0
    %v1236 = vmul.f32 %v1220, %v1234
    %v1237 = vmul.f32 %v1221, %v1235
    %s1238 = scalar_lea.vmem %s7, 32
    %v1239 = vld [vmem:[%s1238] sm:$0xf]
    %v1240 = vld [vmem:[%s1238 + $0x4] sm:$0xf]
    %v1241 = vld [vmem:[%s1238 + $0x8] sm:$0xf]
    %v1242 = vld [vmem:[%s1238 + $0xc] sm:$0xf]
    %v1243 = vld [vmem:[%s1238 + $0x10] sm:$0xf]
    %v1244 = vld [vmem:[%s1238 + $0x14] sm:$0xf]
    %v1245 = vld [vmem:[%s1238 + $0x18] sm:$0xf]
    %v1246 = vld [vmem:[%s1238 + $0x1c] sm:$0xf]
    %v1247 = vpack.c.bf16 %v1237, %v1236
    %v1248 = vlaneseq
    %v1249 = vshrl.u32 %v1248, 7
    %v1250 = vsub.s32 5, %v1249
    %v1251 = vrot.slane %v721, %v1250
    %v1260 = vunpack.c.l.b16 %v1239
    %v1261 = vunpack.c.l.b16 %v1240
    %v1262 = vunpack.c.l.b16 %v1241
    %v1263 = vunpack.c.l.b16 %v1242
    %v1264 = vunpack.c.l.b16 %v1243
    %v1265 = vunpack.c.l.b16 %v1244
    %v1266 = vunpack.c.l.b16 %v1245
    %v1267 = vunpack.c.l.b16 %v1246
    %v1268 = vpack.c.b16 %v1261, %v1260
    %v1269 = vpack.c.b16 %v1263, %v1262
    %v1270 = vpack.c.b16 %v1265, %v1264
    %v1271 = vpack.c.b16 %v1267, %v1266
    %v1277 = vsel %vm635, %v1247, 0
    %1279 = vmatprep.subr.bf16.mxu0 0
    %1280 = vmatpush1.bf16.msra.mxu0 %v1268
    %1281 = vmatprep.subr.bf16.mxu0 0
    %1282 = vmatpush1.bf16.msra.mxu0 %v1269
    %1283 = vmatprep.subr.bf16.mxu0 0
    %1284 = vmatpush1.bf16.msra.mxu0 %v1270
    %1285 = vmatprep.subr.bf16.mxu0 0
    %1286 = vmatpush1.bf16.msra.mxu0 %v1271
    %1287 = vmatprep.subr.bf16.mxu0 0
    %1288 = vmatpush1.bf16.msra.mxu0 0
    %1289 = vmatprep.subr.bf16.mxu0 0
    %1290 = vmatpush1.bf16.msra.mxu0 0
    %1291 = vmatprep.subr.bf16.mxu0 0
    %1292 = vmatpush1.bf16.msra.mxu0 0
    %1293 = vmatprep.subr.bf16.mxu0 0
    %1294 = vmatpush1.bf16.msra.mxu0 0
    %1295 = vmatprep.subr.bf16.mxu0 0
    %1296 = vmatpush1.bf16.msra.mxu0 0
    %1297 = vmatprep.subr.bf16.mxu0 0
    %1298 = vmatpush1.bf16.msra.mxu0 0
    %1299 = vmatprep.subr.bf16.mxu0 0
    %1300 = vmatpush1.bf16.msra.mxu0 0
    %1301 = vmatprep.subr.bf16.mxu0 0
    %1302 = vmatpush1.bf16.msra.mxu0 0
    %1303 = vmatprep.subr.bf16.mxu0 0
    %1304 = vmatpush1.bf16.msra.mxu0 0
    %1305 = vmatprep.subr.bf16.mxu0 0
    %1306 = vmatpush1.bf16.msra.mxu0 0
    %1307 = vmatprep.subr.bf16.mxu0 0
    %1308 = vmatpush1.bf16.msra.mxu0 0
    %1309 = vmatprep.subr.bf16.mxu0 0
    %1310 = vmatpush1.bf16.msra.mxu0 0
    %1311 = vmatprep.mubr.bf16.mxu0 0
    %1312 = vmatmul.mubr.bf16.gmra.mrb[0].mxu0 %v1277
    %v1313 = vpop.f32.mrb[0].mxu0
    %v1314 = vadd.f32 %v1251, %v1313
    %v1315 = vpop.f32.mrb[0].mxu0
    %v1316 = vpop.f32.mrb[0].mxu0
    %v1317 = vadd.f32 %v1251, %v1316
    %v1318 = vpop.f32.mrb[0].mxu0
    %1319 = vdwg.mxu0
    %v1320 = vadd.f32 %v1314, %v1152
    %v1321 = vadd.f32 %v1317, %v1153
    %v1322 = vsel %vm43, %v1320, 0.0
    %1323 = vadd.xlane.f32.xlu0 %v1322
    %v1324 = vpop.xlane.xlu0 %1323
    %v1325 = vsel %vm43, %v1321, 0.0
    %1326 = vadd.xlane.f32.xlu0 %v1325
    %v1327 = vpop.xlane.xlu0 %1326
    %v1328 = vmul.f32 %v1324, %v50
    %v1329 = vmul.f32 %v1327, %v50
    %v1330 = vsub.f32 %v1320, %v1328
    %v1331 = vsub.f32 %v1321, %v1329
    %v1332 = vmul.f32 %v1330, %v1330
    %v1333 = vmul.f32 %v1331, %v1331
    %v1334 = vsel %vm43, %v1332, 0.0
    %1335 = vadd.xlane.f32.xlu0 %v1334
    %v1336 = vpop.xlane.xlu0 %1335
    %v1337 = vsel %vm43, %v1333, 0.0
    %1338 = vadd.xlane.f32.xlu0 %v1337
    %v1339 = vpop.xlane.xlu0 %1338
    %v1340 = vmul.f32 %v1336, %v50
    %v1341 = vmul.f32 %v1339, %v50
    %v1342 = vadd.f32 %v1340, 1e-12
    %v1343 = vadd.f32 %v1341, 1e-12
    %v1344 = vrsqrt.pop %v1342
    %v1345 = vrsqrt.pop %v1343
    %v1346 = vmul.f32 %v1330, %v1344
    %v1347 = vmul.f32 %v1331, %v1345
    %v1348 = vlaneseq
    %v1349 = vshrl.u32 %v1348, 7
    %v1350 = vsub.s32 6, %v1349
    %v1351 = vrot.slane %v721, %v1350
    %v1352 = vmul.f32 %v1346, %v1351
    %v1353 = vmul.f32 %v1347, %v1351
    %v1354 = vlaneseq
    %v1355 = vshrl.u32 %v1354, 7
    %v1356 = vsub.s32 7, %v1355
    %v1357 = vrot.slane %v721, %v1356
    %v1358 = vadd.f32 %v1352, %v1357
    %v1359 = vadd.f32 %v1353, %v1357
    %v1360 = vlaneseq
    %v1361 = vand.u32 %v1360, 127
    %v1362 = vlaneseq
    %v1363 = vshrl.u32 %v1362, 7
    %v1364 = vmul.u32 %v1363, 8
    %vm1365 = vcmp.eq.s32.totalorder %v1361, %v1364
    %v1366 = vsel %vm1365, 1, 0
    %v1367 = vcvt.s32.f32 %v1366
    %v1369 = vsel %vm153, %v1367, 0
    %1371 = vmatprep.subr.mxu0 0.0
    %1372 = vmatpush1.msra.mxu0 %v1358
    %1373 = vmatprep.subr.mxu0 0.0
    %1374 = vmatpush1.msra.mxu0 %v1359
    %1375 = vmatprep.subr.mxu0 0.0
    %1376 = vmatpush1.msra.mxu0 0.0
    %1377 = vmatprep.subr.mxu0 0.0
    %1378 = vmatpush1.msra.mxu0 0.0
    %1379 = vmatprep.subr.mxu0 0.0
    %1380 = vmatpush1.msra.mxu0 0.0
    %1381 = vmatprep.subr.mxu0 0.0
    %1382 = vmatpush1.msra.mxu0 0.0
    %1383 = vmatprep.subr.mxu0 0.0
    %1384 = vmatpush1.msra.mxu0 0.0
    %1385 = vmatprep.subr.mxu0 0.0
    %1386 = vmatpush1.msra.mxu0 0.0
    %1387 = vmatprep.subr.mxu0 0.0
    %1388 = vmatpush1.msra.mxu0 0.0
    %1389 = vmatprep.subr.mxu0 0.0
    %1390 = vmatpush1.msra.mxu0 0.0
    %1391 = vmatprep.subr.mxu0 0.0
    %1392 = vmatpush1.msra.mxu0 0.0
    %1393 = vmatprep.subr.mxu0 0.0
    %1394 = vmatpush1.msra.mxu0 0.0
    %1395 = vmatprep.subr.mxu0 0.0
    %1396 = vmatpush1.msra.mxu0 0.0
    %1397 = vmatprep.subr.mxu0 0.0
    %1398 = vmatpush1.msra.mxu0 0.0
    %1399 = vmatprep.subr.mxu0 0.0
    %1400 = vmatpush1.msra.mxu0 0.0
    %1401 = vmatprep.subr.mxu0 0.0
    %1402 = vmatpush1.msra.mxu0 0.0
    %1403 = vmatprep.subr.mxu0 0.0
    %1404 = vmatpush1.msra.mxu0 0.0
    %1405 = vmatprep.subr.mxu0 0.0
    %1406 = vmatpush1.msra.mxu0 0.0
    %1407 = vmatprep.subr.mxu0 0.0
    %1408 = vmatpush1.msra.mxu0 0.0
    %1409 = vmatprep.subr.mxu0 0.0
    %1410 = vmatpush1.msra.mxu0 0.0
    %1411 = vmatprep.subr.mxu0 0.0
    %1412 = vmatpush1.msra.mxu0 0.0
    %1413 = vmatprep.subr.mxu0 0.0
    %1414 = vmatpush1.msra.mxu0 0.0
    %1415 = vmatprep.subr.mxu0 0.0
    %1416 = vmatpush1.msra.mxu0 0.0
    %1417 = vmatprep.subr.mxu0 0.0
    %1418 = vmatpush1.msra.mxu0 0.0
    %1419 = vmatprep.subr.mxu0 0.0
    %1420 = vmatpush1.msra.mxu0 0.0
    %1421 = vmatprep.subr.mxu0 0.0
    %1422 = vmatpush1.msra.mxu0 0.0
    %1423 = vmatprep.subr.mxu0 0.0
    %1424 = vmatpush1.msra.mxu0 0.0
    %1425 = vmatprep.subr.mxu0 0.0
    %1426 = vmatpush1.msra.mxu0 0.0
    %1427 = vmatprep.subr.mxu0 0.0
    %1428 = vmatpush1.msra.mxu0 0.0
    %1429 = vmatprep.subr.mxu0 0.0
    %1430 = vmatpush1.msra.mxu0 0.0
    %1431 = vmatprep.subr.mxu0 0.0
    %1432 = vmatpush1.msra.mxu0 0.0
    %1433 = vmatprep.subr.mxu0 0.0
    %1434 = vmatpush1.msra.mxu0 0.0
    %1435 = vmatprep.mubr.f32.mxu0 0.0
    %1436 = vmatmul.mubr.f32.gmra.mrb[0].mxu0 %v1369
    %v1437 = vpop.f32.mrb[0].mxu0
    %v1438 = vadd.f32 0.0, %v1437
    %v1439 = vpop.f32.mrb[0].mxu0
    %1440 = vdwg.mxu0
    %v1441 = vld [vmem:[%s8] sm:$0xf]
    %v1442 = vld [vmem:[%s8 + $0x4] sm:$0xf]
    %v1443 = vld [vmem:[%s8 + $0x8] sm:$0xf]
    %v1444 = vld [vmem:[%s8 + $0xc] sm:$0xf]
    %v1445 = vpack.c.bf16 %v1438, %v1438
    %v1446 = vld [vmem:[%s3 + $0x2] sm:$0x1]
    %v1447 = vlaneseq
    %v1448 = vshrl.u32 %v1447, 7
    %v1449 = vsub.s32 0, %v1448
    %v1450 = vrot.slane %v1446, %v1449
    %v1455 = vunpack.c.l.b16 %v1441
    %v1456 = vunpack.c.l.b16 %v1442
    %v1457 = vunpack.c.l.b16 %v1443
    %v1458 = vunpack.c.l.b16 %v1444
    %v1459 = vpack.c.b16 %v1456, %v1455
    %v1460 = vpack.c.b16 %v1458, %v1457
    %v1464 = vsel %vm43, %v1445, 0
    %1466 = vmatprep.subr.bf16.mxu0 0
    %1467 = vmatpush1.bf16.msra.mxu0 %v1459
    %1468 = vmatprep.subr.bf16.mxu0 0
    %1469 = vmatpush1.bf16.msra.mxu0 %v1460
    %1470 = vmatprep.subr.bf16.mxu0 0
    %1471 = vmatpush1.bf16.msra.mxu0 0
    %1472 = vmatprep.subr.bf16.mxu0 0
    %1473 = vmatpush1.bf16.msra.mxu0 0
    %1474 = vmatprep.subr.bf16.mxu0 0
    %1475 = vmatpush1.bf16.msra.mxu0 0
    %1476 = vmatprep.subr.bf16.mxu0 0
    %1477 = vmatpush1.bf16.msra.mxu0 0
    %1478 = vmatprep.subr.bf16.mxu0 0
    %1479 = vmatpush1.bf16.msra.mxu0 0
    %1480 = vmatprep.subr.bf16.mxu0 0
    %1481 = vmatpush1.bf16.msra.mxu0 0
    %1482 = vmatprep.subr.bf16.mxu0 0
    %1483 = vmatpush1.bf16.msra.mxu0 0
    %1484 = vmatprep.subr.bf16.mxu0 0
    %1485 = vmatpush1.bf16.msra.mxu0 0
    %1486 = vmatprep.subr.bf16.mxu0 0
    %1487 = vmatpush1.bf16.msra.mxu0 0
    %1488 = vmatprep.subr.bf16.mxu0 0
    %1489 = vmatpush1.bf16.msra.mxu0 0
    %1490 = vmatprep.subr.bf16.mxu0 0
    %1491 = vmatpush1.bf16.msra.mxu0 0
    %1492 = vmatprep.subr.bf16.mxu0 0
    %1493 = vmatpush1.bf16.msra.mxu0 0
    %1494 = vmatprep.subr.bf16.mxu0 0
    %1495 = vmatpush1.bf16.msra.mxu0 0
    %1496 = vmatprep.subr.bf16.mxu0 0
    %1497 = vmatpush1.bf16.msra.mxu0 0
    %1498 = vmatprep.mubr.bf16.mxu0 0
    %1499 = vmatmul.mubr.bf16.gmra.mrb[0].mxu0 %v1464
    %v1500 = vpop.f32.mrb[0].mxu0
    %v1501 = vadd.f32 %v1450, %v1500
    %v1502 = vpop.f32.mrb[0].mxu0
    %v1503 = vpop.f32.mrb[0].mxu0
    %v1504 = vpop.f32.mrb[0].mxu0
    %1505 = vdwg.mxu0
    %v1506 = vtanh.pop %v1501
    %v1507 = vld [vmem:[%s9] sm:$0xf]
    %v1508 = vld [vmem:[%s9 + $0x4] sm:$0xf]
    %v1509 = vld [vmem:[%s9 + $0x8] sm:$0xf]
    %v1510 = vld [vmem:[%s9 + $0xc] sm:$0xf]
    %v1511 = vpack.c.bf16 %v1506, %v1506
    %v1512 = vld [vmem:[%s3 + $0x3] sm:$0x1]
    %v1513 = vlaneseq
    %v1514 = vshrl.u32 %v1513, 7
    %v1515 = vsub.s32 0, %v1514
    %v1516 = vrot.slane %v1512, %v1515
    %v1521 = vunpack.c.l.b16 %v1507
    %v1522 = vunpack.c.l.b16 %v1508
    %v1523 = vunpack.c.l.b16 %v1509
    %v1524 = vunpack.c.l.b16 %v1510
    %v1525 = vpack.c.b16 %v1522, %v1521
    %v1526 = vpack.c.b16 %v1524, %v1523
    %v1530 = vsel %vm43, %v1511, 0
    %1532 = vmatprep.subr.bf16.mxu0 0
    %1533 = vmatpush1.bf16.msra.mxu0 %v1525
    %1534 = vmatprep.subr.bf16.mxu0 0
    %1535 = vmatpush1.bf16.msra.mxu0 %v1526
    %1536 = vmatprep.subr.bf16.mxu0 0
    %1537 = vmatpush1.bf16.msra.mxu0 0
    %1538 = vmatprep.subr.bf16.mxu0 0
    %1539 = vmatpush1.bf16.msra.mxu0 0
    %1540 = vmatprep.subr.bf16.mxu0 0
    %1541 = vmatpush1.bf16.msra.mxu0 0
    %1542 = vmatprep.subr.bf16.mxu0 0
    %1543 = vmatpush1.bf16.msra.mxu0 0
    %1544 = vmatprep.subr.bf16.mxu0 0
    %1545 = vmatpush1.bf16.msra.mxu0 0
    %1546 = vmatprep.subr.bf16.mxu0 0
    %1547 = vmatpush1.bf16.msra.mxu0 0
    %1548 = vmatprep.subr.bf16.mxu0 0
    %1549 = vmatpush1.bf16.msra.mxu0 0
    %1550 = vmatprep.subr.bf16.mxu0 0
    %1551 = vmatpush1.bf16.msra.mxu0 0
    %1552 = vmatprep.subr.bf16.mxu0 0
    %1553 = vmatpush1.bf16.msra.mxu0 0
    %1554 = vmatprep.subr.bf16.mxu0 0
    %1555 = vmatpush1.bf16.msra.mxu0 0
    %1556 = vmatprep.subr.bf16.mxu0 0
    %1557 = vmatpush1.bf16.msra.mxu0 0
    %1558 = vmatprep.subr.bf16.mxu0 0
    %1559 = vmatpush1.bf16.msra.mxu0 0
    %1560 = vmatprep.subr.bf16.mxu0 0
    %1561 = vmatpush1.bf16.msra.mxu0 0
    %1562 = vmatprep.subr.bf16.mxu0 0
    %1563 = vmatpush1.bf16.msra.mxu0 0
    %1564 = vmatprep.mubr.bf16.mxu0 0
    %1565 = vmatmul.mubr.bf16.gmra.mrb[0].mxu0 %v1530
    %v1566 = vpop.f32.mrb[0].mxu0
    %v1567 = vadd.f32 %v1516, %v1566
    %v1568 = vpop.f32.mrb[0].mxu0
    %v1569 = vpop.f32.mrb[0].mxu0
    %v1570 = vpop.f32.mrb[0].mxu0
    %1571 = vdwg.mxu0
    %vm1572 = vcmask 9216
    %1573 = vst.msk [vmem:[#allocation2] sm:$0x3] %vm1572, %v1567
    // Predicated region
    $region42: #{text_classifier_forward.1} parent=1 // pred_check
      _
    $region43: #{text_classifier_forward.1} parent=1 // pred_check_branch
      %1575 = sbr.rel (0) target = $region45
    $region44: #{text_classifier_forward.1} parent=1 // pred_region
      %s1577 = ssub.s32 32, 32
      %1578 = vsyncadd [#allocation3], %s1577
      %s1580 = sshll.u32 [#allocation2], 4
      %s1581 = int_to_ptr.vmem [resolvable:$true] %s1580
      %1583 = dma.vmem_to_hbm [thread:$0]  %s1581, 32, %s10, [#allocation3]
    $region45: #{text_classifier_forward.1} parent=1 // pred_fallthru
      _
    // Predicated region
    $region46: #{text_classifier_forward.1} parent=1 // pred_check
      _
    $region47: #{text_classifier_forward.1} parent=1 // pred_check_branch
      %1585 = sbr.rel (0) target = $region49
    $region48: #{text_classifier_forward.1} parent=1 // pred_region
      %1586 = dma.done [#allocation3], 32
    $region49: #{text_classifier_forward.1} parent=1 // pred_fallthru
      _
    %1587 = vsyncpa [#allocation3], 1

</llo_original>
